<compile_context>
chip_gen: v6e
topology: v6e:2x2x1
jax: 0.10.0
libtpu: 0.0.40
codegen_flags: <defaults>
</compile_context>

<pallas_src>
import functools

import jax
import jax.numpy as jnp
from jax.experimental import pallas as pl
from jax.experimental.pallas import tpu as pltpu


def _round_up(v, m):
    return (v + m - 1) // m * m


# ---------------------------------------------------------------------------
# Fused whole-graph kernel (no grid, everything VMEM resident).
# ---------------------------------------------------------------------------
def _sage_fused_kernel(x_ref, adj_ref, inv_deg_ref, *refs, layer_specs):
    """x_ref (N,Fin) bf16, adj_ref (N,N) bf16, inv_deg_ref (N,1) f32,
    refs = [w0, b0, w1, b1, ..., out_ref]."""
    out_ref = refs[-1]
    adj = adj_ref[...]                    # (N, N) bf16 {0,1}
    inv_deg = inv_deg_ref[...]            # (N, 1) f32, exact, precomputed
    h = x_ref[...]                        # (N, Fin) bf16
    n_layers = len(layer_specs)

    for l, (project_first, f_out) in enumerate(layer_specs):
        w = refs[2 * l][...]              # bf16, concatenated neigh+root weights
        b = refs[2 * l + 1][...]          # (1, f_out) f32

        if project_first:
            # project first (F_out < F_in): adj matmul carries only F_out cols
            p = jnp.dot(h, w, preferred_element_type=jnp.float32)   # (N, 2*f_out)
            hn = p[:, :f_out].astype(jnp.bfloat16)
            hr = p[:, f_out:]
            out = (jnp.dot(adj, hn, preferred_element_type=jnp.float32) * inv_deg
                   + hr + b)
        else:
            # aggregate first, then one fused [neigh | root] linear
            agg = jnp.dot(adj, h, preferred_element_type=jnp.float32) * inv_deg
            xc = jnp.concatenate([agg.astype(jnp.bfloat16), h], axis=-1)
            out = jnp.dot(xc, w, preferred_element_type=jnp.float32) + b

        if l < n_layers - 1:
            # ReLU; Dropout(p=0.5) between layers is identity in eval mode.
            h = jnp.maximum(out, 0.0).astype(jnp.bfloat16)
        else:
            # log_softmax over (padded, -1e30-masked) class dim, f32-exact.
            mx = jnp.max(out, axis=1, keepdims=True)
            z = out - mx
            lse = jnp.log(jnp.sum(jnp.exp(z), axis=1, keepdims=True))
            out_ref[...] = (z - lse).astype(out_ref.dtype)


# ---------------------------------------------------------------------------
# Row-tiled single-layer kernel (grid over target-node row tiles).
# ---------------------------------------------------------------------------
def _sage_layer_kernel(adj_ref, h_ref, inv_deg_ref, w_ref, b_ref, o_ref, *,
                       tile_rows, is_last):
    """adj_ref (T,N) bf16 tile, h_ref (N,Fin) bf16 resident, inv_deg (T,1),
    w_ref (2*Fin,Fout) bf16 (neigh rows then root rows), b_ref (1,Fout) f32."""
    i = pl.program_id(0)
    row0 = pl.multiple_of(i * tile_rows, tile_rows)

    # mean aggregation of incoming neighbours for this row tile (MXU, f32 acc)
    agg = (jnp.dot(adj_ref[...], h_ref[...], preferred_element_type=jnp.float32)
           * inv_deg_ref[...])
    # root-term rows (aligned dynamic slice of the resident h)
    h_rows = h_ref[pl.ds(row0, tile_rows), :]
    xc = jnp.concatenate([agg.astype(jnp.bfloat16), h_rows], axis=-1)
    out = jnp.dot(xc, w_ref[...], preferred_element_type=jnp.float32) + b_ref[...]

    if is_last:
        mx = jnp.max(out, axis=1, keepdims=True)
        z = out - mx
        lse = jnp.log(jnp.sum(jnp.exp(z), axis=1, keepdims=True))
        o_ref[...] = (z - lse).astype(o_ref.dtype)
    else:
        o_ref[...] = jnp.maximum(out, 0.0).astype(o_ref.dtype)


# ---------------------------------------------------------------------------
# Wrapper-side parameter prep (padding + host-side weight concatenation).
# ---------------------------------------------------------------------------
def _prep_layers(params, allow_project_first):
    n_layers = len(params)
    layers = []
    for l, p in enumerate(params):
        f_out, f_in = p["w_neigh"].shape
        f_in_pad = _round_up(f_in, 128)
        f_out_pad = _round_up(f_out, 128)
        wn_t = jnp.zeros((f_in_pad, f_out_pad), jnp.float32
                         ).at[:f_in, :f_out].set(p["w_neigh"].T)
        wr_t = jnp.zeros((f_in_pad, f_out_pad), jnp.float32
                         ).at[:f_in, :f_out].set(p["w_root"].T)
        is_last = l == n_layers - 1
        # padded class columns are masked out of the final softmax via bias
        pad_fill = -1e30 if is_last else 0.0
        bias = jnp.full((1, f_out_pad), pad_fill, jnp.float32
                        ).at[0, :f_out].set(p["bias"].astype(jnp.float32))
        project_first = allow_project_first and (f_out_pad < f_in_pad)
        if project_first:
            w = jnp.concatenate([wn_t, wr_t], axis=1)   # (f_in_pad, 2*f_out_pad)
        else:
            w = jnp.concatenate([wn_t, wr_t], axis=0)   # (2*f_in_pad, f_out_pad)
        layers.append(dict(w=w.astype(jnp.bfloat16), bias=bias,
                           project_first=project_first, is_last=is_last,
                           f_in_pad=f_in_pad, f_out_pad=f_out_pad))
    return layers


def _fused_call(x_pad, adj_bf, inv_deg, layers, c_pad):
    n_pad = adj_bf.shape[0]
    flat, layer_specs = [], []
    for L in layers:
        flat += [L["w"], L["bias"]]
        layer_specs.append((L["project_first"], L["f_out_pad"]))
    layer_specs = tuple(layer_specs)

    in_bytes = (x_pad.nbytes + adj_bf.nbytes + inv_deg.nbytes
                + sum(int(a.nbytes) for a in flat))
    out_bytes = n_pad * c_pad * 4
    max_f = max(max(L["f_in_pad"], L["f_out_pad"]) for L in layers)
    scratch = 6 * n_pad * max_f * 4                      # f32 intermediates headroom
    vmem_limit = int(min(64 * 2**20,
                         max(32 * 2**20, 2 * (in_bytes + out_bytes) + scratch)))

    flops = 0
    for L in layers:
        width = min(L["f_in_pad"], L["f_out_pad"])
        flops += 2 * n_pad * n_pad * width                       # adj matmul
        flops += 2 * n_pad * 2 * L["f_in_pad"] * L["f_out_pad"]  # fused linear
    cost = pl.CostEstimate(flops=int(flops), transcendentals=int(n_pad * c_pad),
                           bytes_accessed=int(in_bytes + out_bytes))

    vmem = pl.BlockSpec(memory_space=pltpu.MemorySpace.VMEM)
    kernel = functools.partial(_sage_fused_kernel, layer_specs=layer_specs)
    return pl.pallas_call(
        kernel,
        out_shape=jax.ShapeDtypeStruct((n_pad, c_pad), jnp.float32),
        in_specs=[vmem] * (3 + len(flat)),
        out_specs=vmem,
        compiler_params=pltpu.CompilerParams(vmem_limit_bytes=vmem_limit),
        cost_estimate=cost,
    )(x_pad, adj_bf, inv_deg, *flat)


def _tiled_call(x_pad, adj_bf, inv_deg, layers, row_tile):
    n_pad = adj_bf.shape[0]
    h = x_pad
    for L in layers:
        f_in_pad, f_out_pad, is_last = L["f_in_pad"], L["f_out_pad"], L["is_last"]
        out_dtype = jnp.float32 if is_last else jnp.bfloat16
        grid = (n_pad // row_tile,)

        resident = h.nbytes + L["w"].nbytes + L["bias"].nbytes + inv_deg.nbytes
        tile_bytes = 2 * (row_tile * n_pad * 2 + row_tile * f_out_pad * 4)  # dbl buf
        vmem_limit = int(min(64 * 2**20,
                             max(32 * 2**20, 2 * (tile_bytes + resident) + (8 << 20))))
        in_bytes = adj_bf.nbytes + h.nbytes + inv_deg.nbytes + L["w"].nbytes
        out_bytes = n_pad * f_out_pad * (4 if is_last else 2)
        cost = pl.CostEstimate(
            flops=int(2 * n_pad * n_pad * f_in_pad
                      + 2 * n_pad * 2 * f_in_pad * f_out_pad),
            transcendentals=int(n_pad * f_out_pad if is_last else 0),
            bytes_accessed=int(in_bytes + out_bytes))

        kernel = functools.partial(_sage_layer_kernel,
                                   tile_rows=row_tile, is_last=is_last)
        h = pl.pallas_call(
            kernel,
            out_shape=jax.ShapeDtypeStruct((n_pad, f_out_pad), out_dtype),
            grid_spec=pltpu.PrefetchScalarGridSpec(
                num_scalar_prefetch=0,
                grid=grid,
                in_specs=[
                    pl.BlockSpec((row_tile, n_pad), lambda i: (i, 0)),   # adj tile
                    pl.BlockSpec((n_pad, f_in_pad), lambda i: (0, 0)),   # h resident
                    pl.BlockSpec((row_tile, 1), lambda i: (i, 0)),       # inv_deg tile
                    pl.BlockSpec(L["w"].shape, lambda i: (0, 0)),        # weights
                    pl.BlockSpec((1, f_out_pad), lambda i: (0, 0)),      # bias
                ],
                out_specs=pl.BlockSpec((row_tile, f_out_pad), lambda i: (i, 0)),
            ),
            compiler_params=pltpu.CompilerParams(
                dimension_semantics=("parallel",),     # v7x: 2 TCs split row tiles
                vmem_limit_bytes=vmem_limit),
            cost_estimate=cost,
        )(adj_bf, h, inv_deg, L["w"], L["bias"])
    return h


def sage_forward(params, x, adj, *, row_tile=None):
    """GraphSAGE.forward: SAGEConv -> ReLU -> Dropout (repeat) -> SAGEConv ->
    log_softmax.  row_tile=None: single fused pallas_call (small graphs).
    row_tile=int: one row-tiled, grid-pipelined pallas_call per layer."""
    n, f_in = x.shape
    n_classes = params[-1]["w_neigh"].shape[0]

    n_pad = _round_up(n, 128)
    if row_tile is not None:
        assert row_tile % 8 == 0
        n_pad = _round_up(n_pad, row_tile)
    f_in_pad = _round_up(f_in, 128)
    c_pad = _round_up(n_classes, 128)

    # lane-dense, zero-padded inputs
    x_pad = jnp.zeros((n_pad, f_in_pad), jnp.bfloat16
                      ).at[:n, :f_in].set(x.astype(jnp.bfloat16))
    adj_pad = jnp.zeros((n_pad, n_pad), jnp.float32).at[:n, :n].set(
        adj.astype(jnp.float32))
    # exact in-degree / reciprocal precomputed OUTSIDE the kernel (f32)
    deg = jnp.sum(adj_pad, axis=1, keepdims=True)
    inv_deg = (1.0 / jnp.maximum(deg, 1.0)).astype(jnp.float32)
    adj_bf = adj_pad.astype(jnp.bfloat16)

    layers = _prep_layers(params, allow_project_first=(row_tile is None))

    if row_tile is None:
        out_pad = _fused_call(x_pad, adj_bf, inv_deg, layers, c_pad)
    else:
        out_pad = _tiled_call(x_pad, adj_bf, inv_deg, layers, row_tile)
    return out_pad[:n, :n_classes]


# ---------------------------------------------------------------------------
# Pure-JAX f32 reference + glue.
# ---------------------------------------------------------------------------
def sage_forward_ref(params, x, adj):
    deg = jnp.maximum(jnp.sum(adj, axis=1, keepdims=True), 1.0)
    h = x
    for i, p in enumerate(params):
        agg = (adj @ h) / deg
        out = agg @ p["w_neigh"].T + h @ p["w_root"].T + p["bias"]
        if i < len(params) - 1:
            h = jax.nn.relu(out)
        else:
            h = jax.nn.log_softmax(out, axis=1)
    return h


def edge_index_to_adj(edge_index, num_nodes):
    src, dst = edge_index[0], edge_index[1]
    adj = jnp.zeros((num_nodes, num_nodes), jnp.float32)
    return adj.at[dst, src].set(1.0)     # edge j -> i  =>  adj[i, j] = 1


def glorot(key, shape, fan_in, fan_out):
    lim = jnp.sqrt(6.0 / (fan_in + fan_out))
    return jax.random.uniform(key, shape, jnp.float32, -lim, lim)


if __name__ == "__main__":
    key = jax.random.PRNGKey(0)
    N, F_IN, HIDDEN, N_CLASSES = 200, 32, [192], 7
    dims = [F_IN] + HIDDEN + [N_CLASSES]          # num_features in GraphSAGE.__init__

    k_x, k_p = jax.random.split(key)
    x = jax.random.normal(k_x, (N, F_IN), jnp.float32)

    # deterministic directed edge list: ring + skip connections, both directions
    src_l, dst_l = [], []
    for i in range(N):
        for d in (1, 3, 7):
            j = (i + d) % N
            src_l += [i, j]
            dst_l += [j, i]
    edge_index = jnp.array([src_l, dst_l], dtype=jnp.int32)
    adj = edge_index_to_adj(edge_index, N)

    # deterministic parameters matching SAGEConv(in, out): lin_l (neighbour,
    # with bias) and lin_r (root, no bias).
    params = []
    layer_keys = jax.random.split(k_p, len(dims) - 1)
    for k, (fi, fo) in zip(layer_keys, zip(dims[:-1], dims[1:])):
        kn, kr = jax.random.split(k)
        params.append(dict(
            w_neigh=glorot(kn, (fo, fi), fi, fo),   # lin_l.weight (out, in)
            w_root=glorot(kr, (fo, fi), fi, fo),    # lin_r.weight (out, in)
            bias=jnp.zeros((fo,), jnp.float32),     # lin_l.bias
        ))

    fused_fn = jax.jit(functools.partial(sage_forward, row_tile=None))
    tiled_fn = jax.jit(functools.partial(sage_forward, row_tile=128))

    out_fused = jax.block_until_ready(fused_fn(params, x, adj))
    out_tiled = jax.block_until_ready(tiled_fn(params, x, adj))

    ref = sage_forward_ref(params, x, adj)

    assert out_fused.shape == (N, N_CLASSES)
    assert out_tiled.shape == (N, N_CLASSES)
    for out in (out_fused, out_tiled):
        # rows of log_softmax must exponentiate to a probability distribution
        assert bool(jnp.allclose(jnp.sum(jnp.exp(out), axis=1), 1.0, atol=1e-3))
        # matches the f32 reference within bf16-matmul tolerance
        assert float(jnp.max(jnp.abs(out - ref))) < 1e-1
        assert float(jnp.mean(jnp.abs(out - ref))) < 2e-2
    print("KERNEL_OK")
</pallas_src>

<mosaic_0001>
module attributes {stable_mosaic.version = 11 : i64} {
  func.func @_sage_fused_kernel(%arg0: memref<256x128xbf16, #tpu.memory_space<vmem>>, %arg1: memref<256x256xbf16, #tpu.memory_space<vmem>>, %arg2: memref<256x1xf32, #tpu.memory_space<vmem>>, %arg3: memref<256x256xbf16, #tpu.memory_space<vmem>>, %arg4: memref<1x256xf32, #tpu.memory_space<vmem>>, %arg5: memref<256x256xbf16, #tpu.memory_space<vmem>>, %arg6: memref<1x128xf32, #tpu.memory_space<vmem>>, %arg7: memref<256x128xf32, #tpu.memory_space<vmem>>) attributes {dimension_semantics = [], scalar_prefetch = 0 : i64, scratch_operands = 0 : i64, tpu.core_type = #tpu.core_type<tc>} {
    %c0 = arith.constant 0 : index
    %c0_0 = arith.constant 0 : index
    %0 = vector.load %arg1[%c0, %c0_0] : memref<256x256xbf16, #tpu.memory_space<vmem>>, vector<256x256xbf16>
    %c0_1 = arith.constant 0 : index
    %c0_2 = arith.constant 0 : index
    %1 = vector.load %arg2[%c0_1, %c0_2] : memref<256x1xf32, #tpu.memory_space<vmem>>, vector<256x1xf32>
    %c0_3 = arith.constant 0 : index
    %c0_4 = arith.constant 0 : index
    %2 = vector.load %arg0[%c0_3, %c0_4] : memref<256x128xbf16, #tpu.memory_space<vmem>>, vector<256x128xbf16>
    %c0_5 = arith.constant 0 : index
    %c0_6 = arith.constant 0 : index
    %3 = vector.load %arg3[%c0_5, %c0_6] : memref<256x256xbf16, #tpu.memory_space<vmem>>, vector<256x256xbf16>
    %c0_7 = arith.constant 0 : index
    %c0_8 = arith.constant 0 : index
    %4 = vector.load %arg4[%c0_7, %c0_8] : memref<1x256xf32, #tpu.memory_space<vmem>>, vector<1x256xf32>
    %cst = arith.constant dense<0.000000e+00> : vector<256x128xf32>
    %5 = tpu.matmul %0, %2, %cst {dimension_numbers = #tpu.dot_dimension_numbers<[1], [0], [0], [1], [0, 0, 1, 1], [], []>} : vector<256x256xbf16>, vector<256x128xbf16>, vector<256x128xf32> -> vector<256x128xf32>
    %6 = vector.broadcast %1 : vector<256x1xf32> to vector<256x128xf32>
    %7 = arith.mulf %5, %6 : vector<256x128xf32>
    %8 = arith.truncf %7 : vector<256x128xf32> to vector<256x128xbf16>
    %9 = tpu.concatenate %8, %2 in 1 : vector<256x128xbf16>, vector<256x128xbf16> -> vector<256x256xbf16>
    %cst_9 = arith.constant dense<0.000000e+00> : vector<256x256xf32>
    %10 = tpu.matmul %9, %3, %cst_9 {dimension_numbers = #tpu.dot_dimension_numbers<[1], [0], [0], [1], [0, 0, 1, 1], [], []>} : vector<256x256xbf16>, vector<256x256xbf16>, vector<256x256xf32> -> vector<256x256xf32>
    %11 = vector.broadcast %4 : vector<1x256xf32> to vector<256x256xf32>
    %12 = arith.addf %10, %11 : vector<256x256xf32>
    %cst_10 = arith.constant 0.000000e+00 : f32
    %13 = vector.broadcast %cst_10 : f32 to vector<256x256xf32>
    %14 = arith.maximumf %12, %13 : vector<256x256xf32>
    %15 = arith.truncf %14 : vector<256x256xf32> to vector<256x256xbf16>
    %c0_11 = arith.constant 0 : index
    %c0_12 = arith.constant 0 : index
    %16 = vector.load %arg5[%c0_11, %c0_12] : memref<256x256xbf16, #tpu.memory_space<vmem>>, vector<256x256xbf16>
    %c0_13 = arith.constant 0 : index
    %c0_14 = arith.constant 0 : index
    %17 = vector.load %arg6[%c0_13, %c0_14] : memref<1x128xf32, #tpu.memory_space<vmem>>, vector<1x128xf32>
    %cst_15 = arith.constant dense<0.000000e+00> : vector<256x256xf32>
    %18 = tpu.matmul %15, %16, %cst_15 {dimension_numbers = #tpu.dot_dimension_numbers<[1], [0], [0], [1], [0, 0, 1, 1], [], []>} : vector<256x256xbf16>, vector<256x256xbf16>, vector<256x256xf32> -> vector<256x256xf32>
    %19 = vector.extract_strided_slice %18 {offsets = [0, 0], sizes = [256, 128], strides = [1, 1]} : vector<256x256xf32> to vector<256x128xf32>
    %20 = arith.truncf %19 : vector<256x128xf32> to vector<256x128xbf16>
    %21 = vector.extract_strided_slice %18 {offsets = [0, 128], sizes = [256, 128], strides = [1, 1]} : vector<256x256xf32> to vector<256x128xf32>
    %cst_16 = arith.constant dense<0.000000e+00> : vector<256x128xf32>
    %22 = tpu.matmul %0, %20, %cst_16 {dimension_numbers = #tpu.dot_dimension_numbers<[1], [0], [0], [1], [0, 0, 1, 1], [], []>} : vector<256x256xbf16>, vector<256x128xbf16>, vector<256x128xf32> -> vector<256x128xf32>
    %23 = vector.broadcast %1 : vector<256x1xf32> to vector<256x128xf32>
    %24 = arith.mulf %22, %23 : vector<256x128xf32>
    %25 = arith.addf %24, %21 : vector<256x128xf32>
    %26 = vector.broadcast %17 : vector<1x128xf32> to vector<256x128xf32>
    %27 = arith.addf %25, %26 : vector<256x128xf32>
    %cst_17 = arith.constant dense<0xFF800000> : vector<256xf32>
    %28 = vector.multi_reduction <maximumf>, %27, %cst_17 [1] : vector<256x128xf32> to vector<256xf32>
    %29 = vector.shape_cast %28 : vector<256xf32> to vector<256x1xf32>
    %30 = vector.broadcast %29 : vector<256x1xf32> to vector<256x128xf32>
    %31 = arith.subf %27, %30 : vector<256x128xf32>
    %32 = math.exp %31 : vector<256x128xf32>
    %cst_18 = arith.constant dense<0.000000e+00> : vector<256xf32>
    %33 = vector.multi_reduction <add>, %32, %cst_18 [1] : vector<256x128xf32> to vector<256xf32>
    %34 = vector.shape_cast %33 : vector<256xf32> to vector<256x1xf32>
    %35 = math.log %34 : vector<256x1xf32>
    %36 = vector.broadcast %35 : vector<256x1xf32> to vector<256x128xf32>
    %37 = arith.subf %31, %36 : vector<256x128xf32>
    %c0_19 = arith.constant 0 : index
    %c0_20 = arith.constant 0 : index
    %38 = vector.load %arg7[%c0_19, %c0_20] : memref<256x128xf32, #tpu.memory_space<vmem>>, vector<256x128xf32>
    tpu.vector_store %arg7[%c0_19, %c0_20], %37 {strides = array<i32>} : memref<256x128xf32, #tpu.memory_space<vmem>>, vector<256x128xf32>,
    return
  }
}

</mosaic_0001>

<llo_original>
// kernel: sage_forward.1
$region0: #{sage_forward.1}
  #allocation0 [shape = 'u32[]', space=smem, size = 0x4, offset = 0x4, fixed_abs, tag = 'smem constant byte address 0x4 - core index']
  #allocation1 [shape = 'u32[144,128]{1,0:T(1,128)}', space=vmem, size = 0x12000, scoped, tag = 'internal scratch']
  %s0 = inlined_call_operand.vmem [shape: bf16[256,128], index: 0, kind: input, shape index: {}]
  %s1 = inlined_call_operand.vmem [shape: bf16[256,256], index: 1, kind: input, shape index: {}]
  %s2 = inlined_call_operand.vmem [shape: f32[256,1], index: 2, kind: input, shape index: {}]
  %s3 = inlined_call_operand.vmem [shape: bf16[256,256], index: 3, kind: input, shape index: {}]
  %s4 = inlined_call_operand.vmem [shape: f32[1,256], index: 4, kind: input, shape index: {}]
  %s5 = inlined_call_operand.vmem [shape: bf16[256,256], index: 5, kind: input, shape index: {}]
  %s6 = inlined_call_operand.vmem [shape: f32[1,128], index: 6, kind: input, shape index: {}]
  %s7 = inlined_call_operand.vmem [shape: f32[256,128], index: 7, kind: output, shape index: {}]
  %s8 = sld [smem:[#allocation0]]
  $region38: #{sage_forward.1} parent=0
    _
  %s10 = ssub.s32 1, %s8
  %s11 = scalar_select 0, %s10, %s8
  // Predicated region
  $region2: #{sage_forward.1} parent=0 // pred_check
    _
  $region3: #{sage_forward.1} parent=0 // pred_check_branch
    %13 = sbr.rel (0) target = $region5
  $region4: #{sage_forward.1} parent=0 // pred_region
    _
  $region5: #{sage_forward.1} parent=0 // pred_fallthru
    _
  // Predicated region
  $region6: #{sage_forward.1} parent=0 // pred_check
    _
  $region7: #{sage_forward.1} parent=0 // pred_check_branch
    %15 = sbr.rel (0) target = $region9
  $region8: #{sage_forward.1} parent=0 // pred_region
    _
  $region9: #{sage_forward.1} parent=0 // pred_fallthru
    _
  // Predicated region
  $region10: #{sage_forward.1} parent=0 // pred_check
    _
  $region11: #{sage_forward.1} parent=0 // pred_check_branch
    %17 = sbr.rel (0) target = $region13
  $region12: #{sage_forward.1} parent=0 // pred_region
    _
  $region13: #{sage_forward.1} parent=0 // pred_fallthru
    _
  // Predicated region
  $region14: #{sage_forward.1} parent=0 // pred_check
    _
  $region15: #{sage_forward.1} parent=0 // pred_check_branch
    %19 = sbr.rel (0) target = $region17
  $region16: #{sage_forward.1} parent=0 // pred_region
    _
  $region17: #{sage_forward.1} parent=0 // pred_fallthru
    _
  // Predicated region
  $region18: #{sage_forward.1} parent=0 // pred_check
    _
  $region19: #{sage_forward.1} parent=0 // pred_check_branch
    %21 = sbr.rel (0) target = $region21
  $region20: #{sage_forward.1} parent=0 // pred_region
    _
  $region21: #{sage_forward.1} parent=0 // pred_fallthru
    _
  // Predicated region
  $region22: #{sage_forward.1} parent=0 // pred_check
    _
  $region23: #{sage_forward.1} parent=0 // pred_check_branch
    %23 = sbr.rel (0) target = $region25
  $region24: #{sage_forward.1} parent=0 // pred_region
    _
  $region25: #{sage_forward.1} parent=0 // pred_fallthru
    _
  // Predicated region
  $region26: #{sage_forward.1} parent=0 // pred_check
    _
  $region27: #{sage_forward.1} parent=0 // pred_check_branch
    %25 = sbr.rel (0) target = $region29
  $region28: #{sage_forward.1} parent=0 // pred_region
    _
  $region29: #{sage_forward.1} parent=0 // pred_fallthru
    _
  %v27 = vld [vmem:[%s1] sm:$0xff]
  %v28 = vld [vmem:[%s1 + $0x8] sm:$0xff]
  %v29 = vld [vmem:[%s1 + $0x10] sm:$0xff]
  %v30 = vld [vmem:[%s1 + $0x18] sm:$0xff]
  %v31 = vld [vmem:[%s1 + $0x20] sm:$0xff]
  %v32 = vld [vmem:[%s1 + $0x28] sm:$0xff]
  %v33 = vld [vmem:[%s1 + $0x30] sm:$0xff]
  %v34 = vld [vmem:[%s1 + $0x38] sm:$0xff]
  %v35 = vld [vmem:[%s1 + $0x40] sm:$0xff]
  %v36 = vld [vmem:[%s1 + $0x48] sm:$0xff]
  %v37 = vld [vmem:[%s1 + $0x50] sm:$0xff]
  %v38 = vld [vmem:[%s1 + $0x58] sm:$0xff]
  %v39 = vld [vmem:[%s1 + $0x60] sm:$0xff]
  %v40 = vld [vmem:[%s1 + $0x68] sm:$0xff]
  %v41 = vld [vmem:[%s1 + $0x70] sm:$0xff]
  %v42 = vld [vmem:[%s1 + $0x78] sm:$0xff]
  %v43 = vld [vmem:[%s1 + $0x80] sm:$0xff]
  %v44 = vld [vmem:[%s1 + $0x88] sm:$0xff]
  %v45 = vld [vmem:[%s1 + $0x90] sm:$0xff]
  %v46 = vld [vmem:[%s1 + $0x98] sm:$0xff]
  %v47 = vld [vmem:[%s1 + $0xa0] sm:$0xff]
  %v48 = vld [vmem:[%s1 + $0xa8] sm:$0xff]
  %v49 = vld [vmem:[%s1 + $0xb0] sm:$0xff]
  %v50 = vld [vmem:[%s1 + $0xb8] sm:$0xff]
  %v51 = vld [vmem:[%s1 + $0xc0] sm:$0xff]
  %v52 = vld [vmem:[%s1 + $0xc8] sm:$0xff]
  %v53 = vld [vmem:[%s1 + $0xd0] sm:$0xff]
  %v54 = vld [vmem:[%s1 + $0xd8] sm:$0xff]
  %v55 = vld [vmem:[%s1 + $0xe0] sm:$0xff]
  %v56 = vld [vmem:[%s1 + $0xe8] sm:$0xff]
  %v57 = vld [vmem:[%s1 + $0xf0] sm:$0xff]
  %v58 = vld [vmem:[%s1 + $0xf8] sm:$0xff]
  %v59 = vld [vmem:[%s2] sm:$0xff]
  %v60 = vld [vmem:[%s2 + $0x8] sm:$0xff]
  %v61 = vld [vmem:[%s2 + $0x10] sm:$0xff]
  %v62 = vld [vmem:[%s2 + $0x18] sm:$0xff]
  %v63 = vld [vmem:[%s2 + $0x20] sm:$0xff]
  %v64 = vld [vmem:[%s2 + $0x28] sm:$0xff]
  %v65 = vld [vmem:[%s2 + $0x30] sm:$0xff]
  %v66 = vld [vmem:[%s2 + $0x38] sm:$0xff]
  %v67 = vld [vmem:[%s2 + $0x40] sm:$0xff]
  %v68 = vld [vmem:[%s2 + $0x48] sm:$0xff]
  %v69 = vld [vmem:[%s2 + $0x50] sm:$0xff]
  %v70 = vld [vmem:[%s2 + $0x58] sm:$0xff]
  %v71 = vld [vmem:[%s2 + $0x60] sm:$0xff]
  %v72 = vld [vmem:[%s2 + $0x68] sm:$0xff]
  %v73 = vld [vmem:[%s2 + $0x70] sm:$0xff]
  %v74 = vld [vmem:[%s2 + $0x78] sm:$0xff]
  %v75 = vld [vmem:[%s2 + $0x80] sm:$0xff]
  %v76 = vld [vmem:[%s2 + $0x88] sm:$0xff]
  %v77 = vld [vmem:[%s2 + $0x90] sm:$0xff]
  %v78 = vld [vmem:[%s2 + $0x98] sm:$0xff]
  %v79 = vld [vmem:[%s2 + $0xa0] sm:$0xff]
  %v80 = vld [vmem:[%s2 + $0xa8] sm:$0xff]
  %v81 = vld [vmem:[%s2 + $0xb0] sm:$0xff]
  %v82 = vld [vmem:[%s2 + $0xb8] sm:$0xff]
  %v83 = vld [vmem:[%s2 + $0xc0] sm:$0xff]
  %v84 = vld [vmem:[%s2 + $0xc8] sm:$0xff]
  %v85 = vld [vmem:[%s2 + $0xd0] sm:$0xff]
  %v86 = vld [vmem:[%s2 + $0xd8] sm:$0xff]
  %v87 = vld [vmem:[%s2 + $0xe0] sm:$0xff]
  %v88 = vld [vmem:[%s2 + $0xe8] sm:$0xff]
  %v89 = vld [vmem:[%s2 + $0xf0] sm:$0xff]
  %v90 = vld [vmem:[%s2 + $0xf8] sm:$0xff]
  %v91 = vld [vmem:[%s0] sm:$0xf]
  %v92 = vld [vmem:[%s0 + $0x4] sm:$0xf]
  %v93 = vld [vmem:[%s0 + $0x8] sm:$0xf]
  %v94 = vld [vmem:[%s0 + $0xc] sm:$0xf]
  %v95 = vld [vmem:[%s0 + $0x10] sm:$0xf]
  %v96 = vld [vmem:[%s0 + $0x14] sm:$0xf]
  %v97 = vld [vmem:[%s0 + $0x18] sm:$0xf]
  %v98 = vld [vmem:[%s0 + $0x1c] sm:$0xf]
  %v99 = vld [vmem:[%s0 + $0x20] sm:$0xf]
  %v100 = vld [vmem:[%s0 + $0x24] sm:$0xf]
  %v101 = vld [vmem:[%s0 + $0x28] sm:$0xf]
  %v102 = vld [vmem:[%s0 + $0x2c] sm:$0xf]
  %v103 = vld [vmem:[%s0 + $0x30] sm:$0xf]
  %v104 = vld [vmem:[%s0 + $0x34] sm:$0xf]
  %v105 = vld [vmem:[%s0 + $0x38] sm:$0xf]
  %v106 = vld [vmem:[%s0 + $0x3c] sm:$0xf]
  %v107 = vld [vmem:[%s0 + $0x40] sm:$0xf]
  %v108 = vld [vmem:[%s0 + $0x44] sm:$0xf]
  %v109 = vld [vmem:[%s0 + $0x48] sm:$0xf]
  %v110 = vld [vmem:[%s0 + $0x4c] sm:$0xf]
  %v111 = vld [vmem:[%s0 + $0x50] sm:$0xf]
  %v112 = vld [vmem:[%s0 + $0x54] sm:$0xf]
  %v113 = vld [vmem:[%s0 + $0x58] sm:$0xf]
  %v114 = vld [vmem:[%s0 + $0x5c] sm:$0xf]
  %v115 = vld [vmem:[%s0 + $0x60] sm:$0xf]
  %v116 = vld [vmem:[%s0 + $0x64] sm:$0xf]
  %v117 = vld [vmem:[%s0 + $0x68] sm:$0xf]
  %v118 = vld [vmem:[%s0 + $0x6c] sm:$0xf]
  %v119 = vld [vmem:[%s0 + $0x70] sm:$0xf]
  %v120 = vld [vmem:[%s0 + $0x74] sm:$0xf]
  %v121 = vld [vmem:[%s0 + $0x78] sm:$0xf]
  %v122 = vld [vmem:[%s0 + $0x7c] sm:$0xf]
  %v123 = vld [vmem:[%s3] sm:$0xff]
  %v124 = vld [vmem:[%s3 + $0x8] sm:$0xff]
  %v125 = vld [vmem:[%s3 + $0x10] sm:$0xff]
  %v126 = vld [vmem:[%s3 + $0x18] sm:$0xff]
  %v127 = vld [vmem:[%s3 + $0x20] sm:$0xff]
  %v128 = vld [vmem:[%s3 + $0x28] sm:$0xff]
  %v129 = vld [vmem:[%s3 + $0x30] sm:$0xff]
  %v130 = vld [vmem:[%s3 + $0x38] sm:$0xff]
  %v131 = vld [vmem:[%s3 + $0x40] sm:$0xff]
  %v132 = vld [vmem:[%s3 + $0x48] sm:$0xff]
  %v133 = vld [vmem:[%s3 + $0x50] sm:$0xff]
  %v134 = vld [vmem:[%s3 + $0x58] sm:$0xff]
  %v135 = vld [vmem:[%s3 + $0x60] sm:$0xff]
  %v136 = vld [vmem:[%s3 + $0x68] sm:$0xff]
  %v137 = vld [vmem:[%s3 + $0x70] sm:$0xff]
  %v138 = vld [vmem:[%s3 + $0x78] sm:$0xff]
  %v139 = vld [vmem:[%s3 + $0x80] sm:$0xff]
  %v140 = vld [vmem:[%s3 + $0x88] sm:$0xff]
  %v141 = vld [vmem:[%s3 + $0x90] sm:$0xff]
  %v142 = vld [vmem:[%s3 + $0x98] sm:$0xff]
  %v143 = vld [vmem:[%s3 + $0xa0] sm:$0xff]
  %v144 = vld [vmem:[%s3 + $0xa8] sm:$0xff]
  %v145 = vld [vmem:[%s3 + $0xb0] sm:$0xff]
  %v146 = vld [vmem:[%s3 + $0xb8] sm:$0xff]
  %v147 = vld [vmem:[%s3 + $0xc0] sm:$0xff]
  %v148 = vld [vmem:[%s3 + $0xc8] sm:$0xff]
  %v149 = vld [vmem:[%s3 + $0xd0] sm:$0xff]
  %v150 = vld [vmem:[%s3 + $0xd8] sm:$0xff]
  %v151 = vld [vmem:[%s3 + $0xe0] sm:$0xff]
  %v152 = vld [vmem:[%s3 + $0xe8] sm:$0xff]
  %v153 = vld [vmem:[%s3 + $0xf0] sm:$0xff]
  %v154 = vld [vmem:[%s3 + $0xf8] sm:$0xff]
  %v155 = vld [vmem:[%s4] sm:$0x3]
  %v188 = vunpack.c.l.b16 %v27
  %v189 = vunpack.c.h.b16 %v27
  %v190 = vunpack.c.l.b16 %v28
  %v191 = vunpack.c.h.b16 %v28
  %v192 = vunpack.c.l.b16 %v29
  %v193 = vunpack.c.h.b16 %v29
  %v194 = vunpack.c.l.b16 %v30
  %v195 = vunpack.c.h.b16 %v30
  %v196 = vunpack.c.l.b16 %v31
  %v197 = vunpack.c.h.b16 %v31
  %v198 = vunpack.c.l.b16 %v32
  %v199 = vunpack.c.h.b16 %v32
  %v200 = vunpack.c.l.b16 %v33
  %v201 = vunpack.c.h.b16 %v33
  %v202 = vunpack.c.l.b16 %v34
  %v203 = vunpack.c.h.b16 %v34
  %v204 = vunpack.c.l.b16 %v35
  %v205 = vunpack.c.h.b16 %v35
  %v206 = vunpack.c.l.b16 %v36
  %v207 = vunpack.c.h.b16 %v36
  %v208 = vunpack.c.l.b16 %v37
  %v209 = vunpack.c.h.b16 %v37
  %v210 = vunpack.c.l.b16 %v38
  %v211 = vunpack.c.h.b16 %v38
  %v212 = vunpack.c.l.b16 %v39
  %v213 = vunpack.c.h.b16 %v39
  %v214 = vunpack.c.l.b16 %v40
  %v215 = vunpack.c.h.b16 %v40
  %v216 = vunpack.c.l.b16 %v41
  %v217 = vunpack.c.h.b16 %v41
  %v218 = vunpack.c.l.b16 %v42
  %v219 = vunpack.c.h.b16 %v42
  %v220 = vunpack.c.l.b16 %v43
  %v221 = vunpack.c.h.b16 %v43
  %v222 = vunpack.c.l.b16 %v44
  %v223 = vunpack.c.h.b16 %v44
  %v224 = vunpack.c.l.b16 %v45
  %v225 = vunpack.c.h.b16 %v45
  %v226 = vunpack.c.l.b16 %v46
  %v227 = vunpack.c.h.b16 %v46
  %v228 = vunpack.c.l.b16 %v47
  %v229 = vunpack.c.h.b16 %v47
  %v230 = vunpack.c.l.b16 %v48
  %v231 = vunpack.c.h.b16 %v48
  %v232 = vunpack.c.l.b16 %v49
  %v233 = vunpack.c.h.b16 %v49
  %v234 = vunpack.c.l.b16 %v50
  %v235 = vunpack.c.h.b16 %v50
  %v236 = vunpack.c.l.b16 %v51
  %v237 = vunpack.c.h.b16 %v51
  %v238 = vunpack.c.l.b16 %v52
  %v239 = vunpack.c.h.b16 %v52
  %v240 = vunpack.c.l.b16 %v53
  %v241 = vunpack.c.h.b16 %v53
  %v242 = vunpack.c.l.b16 %v54
  %v243 = vunpack.c.h.b16 %v54
  %v244 = vunpack.c.l.b16 %v55
  %v245 = vunpack.c.h.b16 %v55
  %v246 = vunpack.c.l.b16 %v56
  %v247 = vunpack.c.h.b16 %v56
  %v248 = vunpack.c.l.b16 %v57
  %v249 = vunpack.c.h.b16 %v57
  %v250 = vunpack.c.l.b16 %v58
  %v251 = vunpack.c.h.b16 %v58
  %v252 = vpack.c.b16 %v190, %v188
  %v253 = vpack.c.b16 %v191, %v189
  %v254 = vpack.c.b16 %v194, %v192
  %v255 = vpack.c.b16 %v195, %v193
  %v256 = vpack.c.b16 %v198, %v196
  %v257 = vpack.c.b16 %v199, %v197
  %v258 = vpack.c.b16 %v202, %v200
  %v259 = vpack.c.b16 %v203, %v201
  %v260 = vpack.c.b16 %v206, %v204
  %v261 = vpack.c.b16 %v207, %v205
  %v262 = vpack.c.b16 %v210, %v208
  %v263 = vpack.c.b16 %v211, %v209
  %v264 = vpack.c.b16 %v214, %v212
  %v265 = vpack.c.b16 %v215, %v213
  %v266 = vpack.c.b16 %v218, %v216
  %v267 = vpack.c.b16 %v219, %v217
  %v268 = vpack.c.b16 %v222, %v220
  %v269 = vpack.c.b16 %v223, %v221
  %v270 = vpack.c.b16 %v226, %v224
  %v271 = vpack.c.b16 %v227, %v225
  %v272 = vpack.c.b16 %v230, %v228
  %v273 = vpack.c.b16 %v231, %v229
  %v274 = vpack.c.b16 %v234, %v232
  %v275 = vpack.c.b16 %v235, %v233
  %v276 = vpack.c.b16 %v238, %v236
  %v277 = vpack.c.b16 %v239, %v237
  %v278 = vpack.c.b16 %v242, %v240
  %v279 = vpack.c.b16 %v243, %v241
  %v280 = vpack.c.b16 %v246, %v244
  %v281 = vpack.c.b16 %v247, %v245
  %v282 = vpack.c.b16 %v250, %v248
  %v283 = vpack.c.b16 %v251, %v249
  %v348 = vunpack.c.l.b16 %v91
  %v349 = vunpack.c.l.b16 %v92
  %v350 = vunpack.c.l.b16 %v93
  %v351 = vunpack.c.l.b16 %v94
  %v352 = vunpack.c.l.b16 %v95
  %v353 = vunpack.c.l.b16 %v96
  %v354 = vunpack.c.l.b16 %v97
  %v355 = vunpack.c.l.b16 %v98
  %v356 = vunpack.c.l.b16 %v99
  %v357 = vunpack.c.l.b16 %v100
  %v358 = vunpack.c.l.b16 %v101
  %v359 = vunpack.c.l.b16 %v102
  %v360 = vunpack.c.l.b16 %v103
  %v361 = vunpack.c.l.b16 %v104
  %v362 = vunpack.c.l.b16 %v105
  %v363 = vunpack.c.l.b16 %v106
  %v364 = vunpack.c.l.b16 %v107
  %v365 = vunpack.c.l.b16 %v108
  %v366 = vunpack.c.l.b16 %v109
  %v367 = vunpack.c.l.b16 %v110
  %v368 = vunpack.c.l.b16 %v111
  %v369 = vunpack.c.l.b16 %v112
  %v370 = vunpack.c.l.b16 %v113
  %v371 = vunpack.c.l.b16 %v114
  %v372 = vunpack.c.l.b16 %v115
  %v373 = vunpack.c.l.b16 %v116
  %v374 = vunpack.c.l.b16 %v117
  %v375 = vunpack.c.l.b16 %v118
  %v376 = vunpack.c.l.b16 %v119
  %v377 = vunpack.c.l.b16 %v120
  %v378 = vunpack.c.l.b16 %v121
  %v379 = vunpack.c.l.b16 %v122
  %v380 = vpack.c.b16 %v349, %v348
  %v381 = vpack.c.b16 %v351, %v350
  %v382 = vpack.c.b16 %v353, %v352
  %v383 = vpack.c.b16 %v355, %v354
  %v384 = vpack.c.b16 %v357, %v356
  %v385 = vpack.c.b16 %v359, %v358
  %v386 = vpack.c.b16 %v361, %v360
  %v387 = vpack.c.b16 %v363, %v362
  %v388 = vpack.c.b16 %v365, %v364
  %v389 = vpack.c.b16 %v367, %v366
  %v390 = vpack.c.b16 %v369, %v368
  %v391 = vpack.c.b16 %v371, %v370
  %v392 = vpack.c.b16 %v373, %v372
  %v393 = vpack.c.b16 %v375, %v374
  %v394 = vpack.c.b16 %v377, %v376
  %v395 = vpack.c.b16 %v379, %v378
  %412 = vmatprep.subr.bf16.mxu0 0
  %413 = vmatpush1.bf16.msra.mxu0 %v387
  %414 = vmatprep.subr.bf16.mxu0 0
  %415 = vmatpush1.bf16.msra.mxu0 %v386
  %416 = vmatprep.subr.bf16.mxu0 0
  %417 = vmatpush1.bf16.msra.mxu0 %v385
  %418 = vmatprep.subr.bf16.mxu0 0
  %419 = vmatpush1.bf16.msra.mxu0 %v384
  %420 = vmatprep.subr.bf16.mxu0 0
  %421 = vmatpush1.bf16.msra.mxu0 %v383
  %422 = vmatprep.subr.bf16.mxu0 0
  %423 = vmatpush1.bf16.msra.mxu0 %v382
  %424 = vmatprep.subr.bf16.mxu0 0
  %425 = vmatpush1.bf16.msra.mxu0 %v381
  %426 = vmatprep.subr.bf16.mxu0 0
  %427 = vmatpush1.bf16.msra.mxu0 %v380
  %428 = vmatprep.subr.bf16.mxu0 0
  %429 = vmatpush2.bf16.msra.mxu0 %v395
  %430 = vmatprep.subr.bf16.mxu0 0
  %431 = vmatpush2.bf16.msra.mxu0 %v394
  %432 = vmatprep.subr.bf16.mxu0 0
  %433 = vmatpush2.bf16.msra.mxu0 %v393
  %434 = vmatprep.subr.bf16.mxu0 0
  %435 = vmatpush2.bf16.msra.mxu0 %v392
  %436 = vmatprep.subr.bf16.mxu0 0
  %437 = vmatpush2.bf16.msra.mxu0 %v391
  %438 = vmatprep.subr.bf16.mxu0 0
  %439 = vmatpush2.bf16.msra.mxu0 %v390
  %440 = vmatprep.subr.bf16.mxu0 0
  %441 = vmatpush2.bf16.msra.mxu0 %v389
  %442 = vmatprep.subr.bf16.mxu0 0
  %443 = vmatpush2.bf16.msra.mxu0 %v388
  %444 = vmatprep.mubr.bf16.mxu0 %v253
  %445 = vmatmul.mubr.bf16.gmra.mxu0 %v252
  %v446 = vpop.f32.mrf.mxu0
  %v447 = vadd.f32 0.0, %v446
  %v448 = vpop.f32.mrf.mxu0
  %v449 = vpop.f32.mrf.mxu0
  %v450 = vadd.f32 0.0, %v449
  %v451 = vpop.f32.mrf.mxu0
  %452 = vmatprep.mubr.bf16.mxu0 %v255
  %453 = vmatmul.mubr.bf16.gmra.mxu0 %v254
  %v454 = vpop.f32.mrf.mxu0
  %v455 = vadd.f32 0.0, %v454
  %v456 = vpop.f32.mrf.mxu0
  %v457 = vpop.f32.mrf.mxu0
  %v458 = vadd.f32 0.0, %v457
  %v459 = vpop.f32.mrf.mxu0
  %460 = vmatprep.mubr.bf16.mxu0 %v257
  %461 = vmatmul.mubr.bf16.gmra.mxu0 %v256
  %v462 = vpop.f32.mrf.mxu0
  %v463 = vadd.f32 0.0, %v462
  %v464 = vpop.f32.mrf.mxu0
  %v465 = vpop.f32.mrf.mxu0
  %v466 = vadd.f32 0.0, %v465
  %v467 = vpop.f32.mrf.mxu0
  %468 = vmatprep.mubr.bf16.mxu0 %v259
  %469 = vmatmul.mubr.bf16.gmra.mxu0 %v258
  %v470 = vpop.f32.mrf.mxu0
  %v471 = vadd.f32 0.0, %v470
  %v472 = vpop.f32.mrf.mxu0
  %v473 = vpop.f32.mrf.mxu0
  %v474 = vadd.f32 0.0, %v473
  %v475 = vpop.f32.mrf.mxu0
  %476 = vmatprep.mubr.bf16.mxu0 %v261
  %477 = vmatmul.mubr.bf16.gmra.mxu0 %v260
  %v478 = vpop.f32.mrf.mxu0
  %v479 = vadd.f32 0.0, %v478
  %v480 = vpop.f32.mrf.mxu0
  %v481 = vpop.f32.mrf.mxu0
  %v482 = vadd.f32 0.0, %v481
  %v483 = vpop.f32.mrf.mxu0
  %484 = vmatprep.mubr.bf16.mxu0 %v263
  %485 = vmatmul.mubr.bf16.gmra.mxu0 %v262
  %v486 = vpop.f32.mrf.mxu0
  %v487 = vadd.f32 0.0, %v486
  %v488 = vpop.f32.mrf.mxu0
  %v489 = vpop.f32.mrf.mxu0
  %v490 = vadd.f32 0.0, %v489
  %v491 = vpop.f32.mrf.mxu0
  %492 = vmatprep.mubr.bf16.mxu0 %v265
  %493 = vmatmul.mubr.bf16.gmra.mxu0 %v264
  %v494 = vpop.f32.mrf.mxu0
  %v495 = vadd.f32 0.0, %v494
  %v496 = vpop.f32.mrf.mxu0
  %v497 = vpop.f32.mrf.mxu0
  %v498 = vadd.f32 0.0, %v497
  %v499 = vpop.f32.mrf.mxu0
  %500 = vmatprep.mubr.bf16.mxu0 %v267
  %501 = vmatmul.mubr.bf16.gmra.mxu0 %v266
  %v502 = vpop.f32.mrf.mxu0
  %v503 = vadd.f32 0.0, %v502
  %v504 = vpop.f32.mrf.mxu0
  %v505 = vpop.f32.mrf.mxu0
  %v506 = vadd.f32 0.0, %v505
  %v507 = vpop.f32.mrf.mxu0
  %508 = vmatprep.mubr.bf16.mxu0 %v269
  %509 = vmatmul.mubr.bf16.gmra.mxu0 %v268
  %v510 = vpop.f32.mrf.mxu0
  %v511 = vadd.f32 0.0, %v510
  %v512 = vpop.f32.mrf.mxu0
  %v513 = vpop.f32.mrf.mxu0
  %v514 = vadd.f32 0.0, %v513
  %v515 = vpop.f32.mrf.mxu0
  %516 = vmatprep.mubr.bf16.mxu0 %v271
  %517 = vmatmul.mubr.bf16.gmra.mxu0 %v270
  %v518 = vpop.f32.mrf.mxu0
  %v519 = vadd.f32 0.0, %v518
  %v520 = vpop.f32.mrf.mxu0
  %v521 = vpop.f32.mrf.mxu0
  %v522 = vadd.f32 0.0, %v521
  %v523 = vpop.f32.mrf.mxu0
  %524 = vmatprep.mubr.bf16.mxu0 %v273
  %525 = vmatmul.mubr.bf16.gmra.mxu0 %v272
  %v526 = vpop.f32.mrf.mxu0
  %v527 = vadd.f32 0.0, %v526
  %v528 = vpop.f32.mrf.mxu0
  %v529 = vpop.f32.mrf.mxu0
  %v530 = vadd.f32 0.0, %v529
  %v531 = vpop.f32.mrf.mxu0
  %532 = vmatprep.mubr.bf16.mxu0 %v275
  %533 = vmatmul.mubr.bf16.gmra.mxu0 %v274
  %v534 = vpop.f32.mrf.mxu0
  %v535 = vadd.f32 0.0, %v534
  %v536 = vpop.f32.mrf.mxu0
  %v537 = vpop.f32.mrf.mxu0
  %v538 = vadd.f32 0.0, %v537
  %v539 = vpop.f32.mrf.mxu0
  %540 = vmatprep.mubr.bf16.mxu0 %v277
  %541 = vmatmul.mubr.bf16.gmra.mxu0 %v276
  %v542 = vpop.f32.mrf.mxu0
  %v543 = vadd.f32 0.0, %v542
  %v544 = vpop.f32.mrf.mxu0
  %v545 = vpop.f32.mrf.mxu0
  %v546 = vadd.f32 0.0, %v545
  %v547 = vpop.f32.mrf.mxu0
  %548 = vmatprep.mubr.bf16.mxu0 %v279
  %549 = vmatmul.mubr.bf16.gmra.mxu0 %v278
  %v550 = vpop.f32.mrf.mxu0
  %v551 = vadd.f32 0.0, %v550
  %v552 = vpop.f32.mrf.mxu0
  %v553 = vpop.f32.mrf.mxu0
  %v554 = vadd.f32 0.0, %v553
  %v555 = vpop.f32.mrf.mxu0
  %556 = vmatprep.mubr.bf16.mxu0 %v281
  %557 = vmatmul.mubr.bf16.gmra.mxu0 %v280
  %v558 = vpop.f32.mrf.mxu0
  %v559 = vadd.f32 0.0, %v558
  %v560 = vpop.f32.mrf.mxu0
  %v561 = vpop.f32.mrf.mxu0
  %v562 = vadd.f32 0.0, %v561
  %v563 = vpop.f32.mrf.mxu0
  %564 = vmatprep.mubr.bf16.mxu0 %v283
  %565 = vmatmul.mubr.bf16.gmra.mxu0 %v282
  %v566 = vpop.f32.mrf.mxu0
  %v567 = vadd.f32 0.0, %v566
  %v568 = vpop.f32.mrf.mxu0
  %v569 = vpop.f32.mrf.mxu0
  %v570 = vadd.f32 0.0, %v569
  %v571 = vpop.f32.mrf.mxu0
  %572 = vdwg.mxu0
  %574 = vset.pattern.permute.xlu0 0
  %575 = vperm.xlu0 %574, %v59
  %v576 = vpop.permute.xlu0 %575
  %579 = vset.pattern.permute.xlu0 0
  %580 = vperm.xlu0 %579, %v60
  %v581 = vpop.permute.xlu0 %580
  %584 = vset.pattern.permute.xlu0 0
  %585 = vperm.xlu0 %584, %v61
  %v586 = vpop.permute.xlu0 %585
  %589 = vset.pattern.permute.xlu0 0
  %590 = vperm.xlu0 %589, %v62
  %v591 = vpop.permute.xlu0 %590
  %594 = vset.pattern.permute.xlu0 0
  %595 = vperm.xlu0 %594, %v63
  %v596 = vpop.permute.xlu0 %595
  %599 = vset.pattern.permute.xlu0 0
  %600 = vperm.xlu0 %599, %v64
  %v601 = vpop.permute.xlu0 %600
  %604 = vset.pattern.permute.xlu0 0
  %605 = vperm.xlu0 %604, %v65
  %v606 = vpop.permute.xlu0 %605
  %609 = vset.pattern.permute.xlu0 0
  %610 = vperm.xlu0 %609, %v66
  %v611 = vpop.permute.xlu0 %610
  %614 = vset.pattern.permute.xlu0 0
  %615 = vperm.xlu0 %614, %v67
  %v616 = vpop.permute.xlu0 %615
  %619 = vset.pattern.permute.xlu0 0
  %620 = vperm.xlu0 %619, %v68
  %v621 = vpop.permute.xlu0 %620
  %624 = vset.pattern.permute.xlu0 0
  %625 = vperm.xlu0 %624, %v69
  %v626 = vpop.permute.xlu0 %625
  %629 = vset.pattern.permute.xlu0 0
  %630 = vperm.xlu0 %629, %v70
  %v631 = vpop.permute.xlu0 %630
  %634 = vset.pattern.permute.xlu0 0
  %635 = vperm.xlu0 %634, %v71
  %v636 = vpop.permute.xlu0 %635
  %639 = vset.pattern.permute.xlu0 0
  %640 = vperm.xlu0 %639, %v72
  %v641 = vpop.permute.xlu0 %640
  %644 = vset.pattern.permute.xlu0 0
  %645 = vperm.xlu0 %644, %v73
  %v646 = vpop.permute.xlu0 %645
  %649 = vset.pattern.permute.xlu0 0
  %650 = vperm.xlu0 %649, %v74
  %v651 = vpop.permute.xlu0 %650
  %654 = vset.pattern.permute.xlu0 0
  %655 = vperm.xlu0 %654, %v75
  %v656 = vpop.permute.xlu0 %655
  %659 = vset.pattern.permute.xlu0 0
  %660 = vperm.xlu0 %659, %v76
  %v661 = vpop.permute.xlu0 %660
  %664 = vset.pattern.permute.xlu0 0
  %665 = vperm.xlu0 %664, %v77
  %v666 = vpop.permute.xlu0 %665
  %669 = vset.pattern.permute.xlu0 0
  %670 = vperm.xlu0 %669, %v78
  %v671 = vpop.permute.xlu0 %670
  %674 = vset.pattern.permute.xlu0 0
  %675 = vperm.xlu0 %674, %v79
  %v676 = vpop.permute.xlu0 %675
  %679 = vset.pattern.permute.xlu0 0
  %680 = vperm.xlu0 %679, %v80
  %v681 = vpop.permute.xlu0 %680
  %684 = vset.pattern.permute.xlu0 0
  %685 = vperm.xlu0 %684, %v81
  %v686 = vpop.permute.xlu0 %685
  %689 = vset.pattern.permute.xlu0 0
  %690 = vperm.xlu0 %689, %v82
  %v691 = vpop.permute.xlu0 %690
  %694 = vset.pattern.permute.xlu0 0
  %695 = vperm.xlu0 %694, %v83
  %v696 = vpop.permute.xlu0 %695
  %699 = vset.pattern.permute.xlu0 0
  %700 = vperm.xlu0 %699, %v84
  %v701 = vpop.permute.xlu0 %700
  %704 = vset.pattern.permute.xlu0 0
  %705 = vperm.xlu0 %704, %v85
  %v706 = vpop.permute.xlu0 %705
  %709 = vset.pattern.permute.xlu0 0
  %710 = vperm.xlu0 %709, %v86
  %v711 = vpop.permute.xlu0 %710
  %714 = vset.pattern.permute.xlu0 0
  %715 = vperm.xlu0 %714, %v87
  %v716 = vpop.permute.xlu0 %715
  %719 = vset.pattern.permute.xlu0 0
  %720 = vperm.xlu0 %719, %v88
  %v721 = vpop.permute.xlu0 %720
  %724 = vset.pattern.permute.xlu0 0
  %725 = vperm.xlu0 %724, %v89
  %v726 = vpop.permute.xlu0 %725
  %729 = vset.pattern.permute.xlu0 0
  %730 = vperm.xlu0 %729, %v90
  %v731 = vpop.permute.xlu0 %730
  %v733 = vmul.f32 %v447, %v576
  %v734 = vmul.f32 %v450, %v581
  %v735 = vmul.f32 %v455, %v586
  %v736 = vmul.f32 %v458, %v591
  %v737 = vmul.f32 %v463, %v596
  %v738 = vmul.f32 %v466, %v601
  %v739 = vmul.f32 %v471, %v606
  %v740 = vmul.f32 %v474, %v611
  %v741 = vmul.f32 %v479, %v616
  %v742 = vmul.f32 %v482, %v621
  %v743 = vmul.f32 %v487, %v626
  %v744 = vmul.f32 %v490, %v631
  %v745 = vmul.f32 %v495, %v636
  %v746 = vmul.f32 %v498, %v641
  %v747 = vmul.f32 %v503, %v646
  %v748 = vmul.f32 %v506, %v651
  %v749 = vmul.f32 %v511, %v656
  %v750 = vmul.f32 %v514, %v661
  %v751 = vmul.f32 %v519, %v666
  %v752 = vmul.f32 %v522, %v671
  %v753 = vmul.f32 %v527, %v676
  %v754 = vmul.f32 %v530, %v681
  %v755 = vmul.f32 %v535, %v686
  %v756 = vmul.f32 %v538, %v691
  %v757 = vmul.f32 %v543, %v696
  %v758 = vmul.f32 %v546, %v701
  %v759 = vmul.f32 %v551, %v706
  %v760 = vmul.f32 %v554, %v711
  %v761 = vmul.f32 %v559, %v716
  %v762 = vmul.f32 %v562, %v721
  %v763 = vmul.f32 %v567, %v726
  %v764 = vmul.f32 %v570, %v731
  %v765 = vpack.c.bf16 %v734, %v733
  %v766 = vpack.c.bf16 %v736, %v735
  %v767 = vpack.c.bf16 %v738, %v737
  %v768 = vpack.c.bf16 %v740, %v739
  %v769 = vpack.c.bf16 %v742, %v741
  %v770 = vpack.c.bf16 %v744, %v743
  %v771 = vpack.c.bf16 %v746, %v745
  %v772 = vpack.c.bf16 %v748, %v747
  %v773 = vpack.c.bf16 %v750, %v749
  %v774 = vpack.c.bf16 %v752, %v751
  %v775 = vpack.c.bf16 %v754, %v753
  %v776 = vpack.c.bf16 %v756, %v755
  %v777 = vpack.c.bf16 %v758, %v757
  %v778 = vpack.c.bf16 %v760, %v759
  %v779 = vpack.c.bf16 %v762, %v761
  %v780 = vpack.c.bf16 %v764, %v763
  %v782 = vlaneseq
  %v783 = vshrl.u32 %v782, 7
  %v784 = vsub.s32 0, %v783
  %v785 = vrot.slane %v155, %v784
  %v786 = vlaneseq
  %v787 = vshrl.u32 %v786, 7
  %v788 = vsub.s32 1, %v787
  %v789 = vrot.slane %v155, %v788
  %v824 = vunpack.c.l.b16 %v123
  %v825 = vunpack.c.h.b16 %v123
  %v826 = vunpack.c.l.b16 %v124
  %v827 = vunpack.c.h.b16 %v124
  %v828 = vunpack.c.l.b16 %v125
  %v829 = vunpack.c.h.b16 %v125
  %v830 = vunpack.c.l.b16 %v126
  %v831 = vunpack.c.h.b16 %v126
  %v832 = vunpack.c.l.b16 %v127
  %v833 = vunpack.c.h.b16 %v127
  %v834 = vunpack.c.l.b16 %v128
  %v835 = vunpack.c.h.b16 %v128
  %v836 = vunpack.c.l.b16 %v129
  %v837 = vunpack.c.h.b16 %v129
  %v838 = vunpack.c.l.b16 %v130
  %v839 = vunpack.c.h.b16 %v130
  %v840 = vunpack.c.l.b16 %v131
  %v841 = vunpack.c.h.b16 %v131
  %v842 = vunpack.c.l.b16 %v132
  %v843 = vunpack.c.h.b16 %v132
  %v844 = vunpack.c.l.b16 %v133
  %v845 = vunpack.c.h.b16 %v133
  %v846 = vunpack.c.l.b16 %v134
  %v847 = vunpack.c.h.b16 %v134
  %v848 = vunpack.c.l.b16 %v135
  %v849 = vunpack.c.h.b16 %v135
  %v850 = vunpack.c.l.b16 %v136
  %v851 = vunpack.c.h.b16 %v136
  %v852 = vunpack.c.l.b16 %v137
  %v853 = vunpack.c.h.b16 %v137
  %v854 = vunpack.c.l.b16 %v138
  %v855 = vunpack.c.h.b16 %v138
  %v856 = vunpack.c.l.b16 %v139
  %v857 = vunpack.c.h.b16 %v139
  %v858 = vunpack.c.l.b16 %v140
  %v859 = vunpack.c.h.b16 %v140
  %v860 = vunpack.c.l.b16 %v141
  %v861 = vunpack.c.h.b16 %v141
  %v862 = vunpack.c.l.b16 %v142
  %v863 = vunpack.c.h.b16 %v142
  %v864 = vunpack.c.l.b16 %v143
  %v865 = vunpack.c.h.b16 %v143
  %v866 = vunpack.c.l.b16 %v144
  %v867 = vunpack.c.h.b16 %v144
  %v868 = vunpack.c.l.b16 %v145
  %v869 = vunpack.c.h.b16 %v145
  %v870 = vunpack.c.l.b16 %v146
  %v871 = vunpack.c.h.b16 %v146
  %v872 = vunpack.c.l.b16 %v147
  %v873 = vunpack.c.h.b16 %v147
  %v874 = vunpack.c.l.b16 %v148
  %v875 = vunpack.c.h.b16 %v148
  %v876 = vunpack.c.l.b16 %v149
  %v877 = vunpack.c.h.b16 %v149
  %v878 = vunpack.c.l.b16 %v150
  %v879 = vunpack.c.h.b16 %v150
  %v880 = vunpack.c.l.b16 %v151
  %v881 = vunpack.c.h.b16 %v151
  %v882 = vunpack.c.l.b16 %v152
  %v883 = vunpack.c.h.b16 %v152
  %v884 = vunpack.c.l.b16 %v153
  %v885 = vunpack.c.h.b16 %v153
  %v886 = vunpack.c.l.b16 %v154
  %v887 = vunpack.c.h.b16 %v154
  %v888 = vpack.c.b16 %v826, %v824
  %v889 = vpack.c.b16 %v827, %v825
  %v890 = vpack.c.b16 %v830, %v828
  %v891 = vpack.c.b16 %v831, %v829
  %v892 = vpack.c.b16 %v834, %v832
  %v893 = vpack.c.b16 %v835, %v833
  %v894 = vpack.c.b16 %v838, %v836
  %v895 = vpack.c.b16 %v839, %v837
  %v896 = vpack.c.b16 %v842, %v840
  %v897 = vpack.c.b16 %v843, %v841
  %v898 = vpack.c.b16 %v846, %v844
  %v899 = vpack.c.b16 %v847, %v845
  %v900 = vpack.c.b16 %v850, %v848
  %v901 = vpack.c.b16 %v851, %v849
  %v902 = vpack.c.b16 %v854, %v852
  %v903 = vpack.c.b16 %v855, %v853
  %v904 = vpack.c.b16 %v858, %v856
  %v905 = vpack.c.b16 %v859, %v857
  %v906 = vpack.c.b16 %v862, %v860
  %v907 = vpack.c.b16 %v863, %v861
  %v908 = vpack.c.b16 %v866, %v864
  %v909 = vpack.c.b16 %v867, %v865
  %v910 = vpack.c.b16 %v870, %v868
  %v911 = vpack.c.b16 %v871, %v869
  %v912 = vpack.c.b16 %v874, %v872
  %v913 = vpack.c.b16 %v875, %v873
  %v914 = vpack.c.b16 %v878, %v876
  %v915 = vpack.c.b16 %v879, %v877
  %v916 = vpack.c.b16 %v882, %v880
  %v917 = vpack.c.b16 %v883, %v881
  %v918 = vpack.c.b16 %v886, %v884
  %v919 = vpack.c.b16 %v887, %v885
  %952 = vmatprep.subr.bf16.mxu0 %v903
  %953 = vmatpush1.bf16.msra.mxu0 %v902
  %954 = vmatprep.subr.bf16.mxu0 %v901
  %955 = vmatpush1.bf16.msra.mxu0 %v900
  %956 = vmatprep.subr.bf16.mxu0 %v899
  %957 = vmatpush1.bf16.msra.mxu0 %v898
  %958 = vmatprep.subr.bf16.mxu0 %v897
  %959 = vmatpush1.bf16.msra.mxu0 %v896
  %960 = vmatprep.subr.bf16.mxu0 %v895
  %961 = vmatpush1.bf16.msra.mxu0 %v894
  %962 = vmatprep.subr.bf16.mxu0 %v893
  %963 = vmatpush1.bf16.msra.mxu0 %v892
  %964 = vmatprep.subr.bf16.mxu0 %v891
  %965 = vmatpush1.bf16.msra.mxu0 %v890
  %966 = vmatprep.subr.bf16.mxu0 %v889
  %967 = vmatpush1.bf16.msra.mxu0 %v888
  %968 = vmatprep.subr.bf16.mxu0 %v919
  %969 = vmatpush2.bf16.msra.mxu0 %v918
  %970 = vmatprep.subr.bf16.mxu0 %v917
  %971 = vmatpush2.bf16.msra.mxu0 %v916
  %972 = vmatprep.subr.bf16.mxu0 %v915
  %973 = vmatpush2.bf16.msra.mxu0 %v914
  %974 = vmatprep.subr.bf16.mxu0 %v913
  %975 = vmatpush2.bf16.msra.mxu0 %v912
  %976 = vmatprep.subr.bf16.mxu0 %v911
  %977 = vmatpush2.bf16.msra.mxu0 %v910
  %978 = vmatprep.subr.bf16.mxu0 %v909
  %979 = vmatpush2.bf16.msra.mxu0 %v908
  %980 = vmatprep.subr.bf16.mxu0 %v907
  %981 = vmatpush2.bf16.msra.mxu0 %v906
  %982 = vmatprep.subr.bf16.mxu0 %v905
  %983 = vmatpush2.bf16.msra.mxu0 %v904
  %984 = vmatprep.mubr.bf16.mxu0 %v380
  %985 = vmatmul.mubr.bf16.gmra.mxu0 %v765
  %v986 = vpop.f32.mrf.mxu0
  %v987 = vadd.f32 %v785, %v986
  %v988 = vpop.f32.mrf.mxu0
  %v989 = vadd.f32 %v789, %v988
  %v990 = vpop.f32.mrf.mxu0
  %v991 = vadd.f32 %v785, %v990
  %v992 = vpop.f32.mrf.mxu0
  %v993 = vadd.f32 %v789, %v992
  %994 = vmatprep.mubr.bf16.mxu0 %v381
  %995 = vmatmul.mubr.bf16.gmra.mxu0 %v766
  %v996 = vpop.f32.mrf.mxu0
  %v997 = vadd.f32 %v785, %v996
  %v998 = vpop.f32.mrf.mxu0
  %v999 = vadd.f32 %v789, %v998
  %v1000 = vpop.f32.mrf.mxu0
  %v1001 = vadd.f32 %v785, %v1000
  %v1002 = vpop.f32.mrf.mxu0
  %v1003 = vadd.f32 %v789, %v1002
  %1004 = vmatprep.mubr.bf16.mxu0 %v382
  %1005 = vmatmul.mubr.bf16.gmra.mxu0 %v767
  %v1006 = vpop.f32.mrf.mxu0
  %v1007 = vadd.f32 %v785, %v1006
  %v1008 = vpop.f32.mrf.mxu0
  %v1009 = vadd.f32 %v789, %v1008
  %v1010 = vpop.f32.mrf.mxu0
  %v1011 = vadd.f32 %v785, %v1010
  %v1012 = vpop.f32.mrf.mxu0
  %v1013 = vadd.f32 %v789, %v1012
  %1014 = vmatprep.mubr.bf16.mxu0 %v383
  %1015 = vmatmul.mubr.bf16.gmra.mxu0 %v768
  %v1016 = vpop.f32.mrf.mxu0
  %v1017 = vadd.f32 %v785, %v1016
  %v1018 = vpop.f32.mrf.mxu0
  %v1019 = vadd.f32 %v789, %v1018
  %v1020 = vpop.f32.mrf.mxu0
  %v1021 = vadd.f32 %v785, %v1020
  %v1022 = vpop.f32.mrf.mxu0
  %v1023 = vadd.f32 %v789, %v1022
  %1024 = vmatprep.mubr.bf16.mxu0 %v384
  %1025 = vmatmul.mubr.bf16.gmra.mxu0 %v769
  %v1026 = vpop.f32.mrf.mxu0
  %v1027 = vadd.f32 %v785, %v1026
  %v1028 = vpop.f32.mrf.mxu0
  %v1029 = vadd.f32 %v789, %v1028
  %v1030 = vpop.f32.mrf.mxu0
  %v1031 = vadd.f32 %v785, %v1030
  %v1032 = vpop.f32.mrf.mxu0
  %v1033 = vadd.f32 %v789, %v1032
  %1034 = vmatprep.mubr.bf16.mxu0 %v385
  %1035 = vmatmul.mubr.bf16.gmra.mxu0 %v770
  %v1036 = vpop.f32.mrf.mxu0
  %v1037 = vadd.f32 %v785, %v1036
  %v1038 = vpop.f32.mrf.mxu0
  %v1039 = vadd.f32 %v789, %v1038
  %v1040 = vpop.f32.mrf.mxu0
  %v1041 = vadd.f32 %v785, %v1040
  %v1042 = vpop.f32.mrf.mxu0
  %v1043 = vadd.f32 %v789, %v1042
  %1044 = vmatprep.mubr.bf16.mxu0 %v386
  %1045 = vmatmul.mubr.bf16.gmra.mxu0 %v771
  %v1046 = vpop.f32.mrf.mxu0
  %v1047 = vadd.f32 %v785, %v1046
  %v1048 = vpop.f32.mrf.mxu0
  %v1049 = vadd.f32 %v789, %v1048
  %v1050 = vpop.f32.mrf.mxu0
  %v1051 = vadd.f32 %v785, %v1050
  %v1052 = vpop.f32.mrf.mxu0
  %v1053 = vadd.f32 %v789, %v1052
  %1054 = vmatprep.mubr.bf16.mxu0 %v387
  %1055 = vmatmul.mubr.bf16.gmra.mxu0 %v772
  %v1056 = vpop.f32.mrf.mxu0
  %v1057 = vadd.f32 %v785, %v1056
  %v1058 = vpop.f32.mrf.mxu0
  %v1059 = vadd.f32 %v789, %v1058
  %v1060 = vpop.f32.mrf.mxu0
  %v1061 = vadd.f32 %v785, %v1060
  %v1062 = vpop.f32.mrf.mxu0
  %v1063 = vadd.f32 %v789, %v1062
  %1064 = vmatprep.mubr.bf16.mxu0 %v388
  %1065 = vmatmul.mubr.bf16.gmra.mxu0 %v773
  %v1066 = vpop.f32.mrf.mxu0
  %v1067 = vadd.f32 %v785, %v1066
  %v1068 = vpop.f32.mrf.mxu0
  %v1069 = vadd.f32 %v789, %v1068
  %v1070 = vpop.f32.mrf.mxu0
  %v1071 = vadd.f32 %v785, %v1070
  %v1072 = vpop.f32.mrf.mxu0
  %v1073 = vadd.f32 %v789, %v1072
  %1074 = vmatprep.mubr.bf16.mxu0 %v389
  %1075 = vmatmul.mubr.bf16.gmra.mxu0 %v774
  %v1076 = vpop.f32.mrf.mxu0
  %v1077 = vadd.f32 %v785, %v1076
  %v1078 = vpop.f32.mrf.mxu0
  %v1079 = vadd.f32 %v789, %v1078
  %v1080 = vpop.f32.mrf.mxu0
  %v1081 = vadd.f32 %v785, %v1080
  %v1082 = vpop.f32.mrf.mxu0
  %v1083 = vadd.f32 %v789, %v1082
  %1084 = vmatprep.mubr.bf16.mxu0 %v390
  %1085 = vmatmul.mubr.bf16.gmra.mxu0 %v775
  %v1086 = vpop.f32.mrf.mxu0
  %v1087 = vadd.f32 %v785, %v1086
  %v1088 = vpop.f32.mrf.mxu0
  %v1089 = vadd.f32 %v789, %v1088
  %v1090 = vpop.f32.mrf.mxu0
  %v1091 = vadd.f32 %v785, %v1090
  %v1092 = vpop.f32.mrf.mxu0
  %v1093 = vadd.f32 %v789, %v1092
  %1094 = vmatprep.mubr.bf16.mxu0 %v391
  %1095 = vmatmul.mubr.bf16.gmra.mxu0 %v776
  %v1096 = vpop.f32.mrf.mxu0
  %v1097 = vadd.f32 %v785, %v1096
  %v1098 = vpop.f32.mrf.mxu0
  %v1099 = vadd.f32 %v789, %v1098
  %v1100 = vpop.f32.mrf.mxu0
  %v1101 = vadd.f32 %v785, %v1100
  %v1102 = vpop.f32.mrf.mxu0
  %v1103 = vadd.f32 %v789, %v1102
  %1104 = vmatprep.mubr.bf16.mxu0 %v392
  %1105 = vmatmul.mubr.bf16.gmra.mxu0 %v777
  %v1106 = vpop.f32.mrf.mxu0
  %v1107 = vadd.f32 %v785, %v1106
  %v1108 = vpop.f32.mrf.mxu0
  %v1109 = vadd.f32 %v789, %v1108
  %v1110 = vpop.f32.mrf.mxu0
  %v1111 = vadd.f32 %v785, %v1110
  %v1112 = vpop.f32.mrf.mxu0
  %v1113 = vadd.f32 %v789, %v1112
  %1114 = vmatprep.mubr.bf16.mxu0 %v393
  %1115 = vmatmul.mubr.bf16.gmra.mxu0 %v778
  %v1116 = vpop.f32.mrf.mxu0
  %v1117 = vadd.f32 %v785, %v1116
  %v1118 = vpop.f32.mrf.mxu0
  %v1119 = vadd.f32 %v789, %v1118
  %v1120 = vpop.f32.mrf.mxu0
  %v1121 = vadd.f32 %v785, %v1120
  %v1122 = vpop.f32.mrf.mxu0
  %v1123 = vadd.f32 %v789, %v1122
  %1124 = vmatprep.mubr.bf16.mxu0 %v394
  %1125 = vmatmul.mubr.bf16.gmra.mxu0 %v779
  %v1126 = vpop.f32.mrf.mxu0
  %v1127 = vadd.f32 %v785, %v1126
  %v1128 = vpop.f32.mrf.mxu0
  %v1129 = vadd.f32 %v789, %v1128
  %v1130 = vpop.f32.mrf.mxu0
  %v1131 = vadd.f32 %v785, %v1130
  %v1132 = vpop.f32.mrf.mxu0
  %v1133 = vadd.f32 %v789, %v1132
  %1134 = vmatprep.mubr.bf16.mxu0 %v395
  %1135 = vmatmul.mubr.bf16.gmra.mxu0 %v780
  %v1136 = vpop.f32.mrf.mxu0
  %v1137 = vadd.f32 %v785, %v1136
  %v1138 = vpop.f32.mrf.mxu0
  %v1139 = vadd.f32 %v789, %v1138
  %v1140 = vpop.f32.mrf.mxu0
  %v1141 = vadd.f32 %v785, %v1140
  %v1142 = vpop.f32.mrf.mxu0
  %v1143 = vadd.f32 %v789, %v1142
  %1144 = vdwg.mxu0
  %v1145 = vmax.f32 %v987, 0.0
  %v1146 = vmax.f32 %v989, 0.0
  %v1147 = vmax.f32 %v991, 0.0
  %v1148 = vmax.f32 %v993, 0.0
  %v1149 = vmax.f32 %v997, 0.0
  %v1150 = vmax.f32 %v999, 0.0
  %v1151 = vmax.f32 %v1001, 0.0
  %v1152 = vmax.f32 %v1003, 0.0
  %v1153 = vmax.f32 %v1007, 0.0
  %v1154 = vmax.f32 %v1009, 0.0
  %v1155 = vmax.f32 %v1011, 0.0
  %v1156 = vmax.f32 %v1013, 0.0
  %v1157 = vmax.f32 %v1017, 0.0
  %v1158 = vmax.f32 %v1019, 0.0
  %v1159 = vmax.f32 %v1021, 0.0
  %v1160 = vmax.f32 %v1023, 0.0
  %v1161 = vmax.f32 %v1027, 0.0
  %v1162 = vmax.f32 %v1029, 0.0
  %v1163 = vmax.f32 %v1031, 0.0
  %v1164 = vmax.f32 %v1033, 0.0
  %v1165 = vmax.f32 %v1037, 0.0
  %v1166 = vmax.f32 %v1039, 0.0
  %v1167 = vmax.f32 %v1041, 0.0
  %v1168 = vmax.f32 %v1043, 0.0
  %v1169 = vmax.f32 %v1047, 0.0
  %v1170 = vmax.f32 %v1049, 0.0
  %v1171 = vmax.f32 %v1051, 0.0
  %v1172 = vmax.f32 %v1053, 0.0
  %v1173 = vmax.f32 %v1057, 0.0
  %v1174 = vmax.f32 %v1059, 0.0
  %v1175 = vmax.f32 %v1061, 0.0
  %v1176 = vmax.f32 %v1063, 0.0
  %v1177 = vmax.f32 %v1067, 0.0
  %v1178 = vmax.f32 %v1069, 0.0
  %v1179 = vmax.f32 %v1071, 0.0
  %v1180 = vmax.f32 %v1073, 0.0
  %v1181 = vmax.f32 %v1077, 0.0
  %v1182 = vmax.f32 %v1079, 0.0
  %v1183 = vmax.f32 %v1081, 0.0
  %v1184 = vmax.f32 %v1083, 0.0
  %v1185 = vmax.f32 %v1087, 0.0
  %v1186 = vmax.f32 %v1089, 0.0
  %v1187 = vmax.f32 %v1091, 0.0
  %v1188 = vmax.f32 %v1093, 0.0
  %v1189 = vmax.f32 %v1097, 0.0
  %v1190 = vmax.f32 %v1099, 0.0
  %v1191 = vmax.f32 %v1101, 0.0
  %v1192 = vmax.f32 %v1103, 0.0
  %v1193 = vmax.f32 %v1107, 0.0
  %v1194 = vmax.f32 %v1109, 0.0
  %v1195 = vmax.f32 %v1111, 0.0
  %v1196 = vmax.f32 %v1113, 0.0
  %v1197 = vmax.f32 %v1117, 0.0
  %v1198 = vmax.f32 %v1119, 0.0
  %v1199 = vmax.f32 %v1121, 0.0
  %v1200 = vmax.f32 %v1123, 0.0
  %v1201 = vmax.f32 %v1127, 0.0
  %v1202 = vmax.f32 %v1129, 0.0
  %v1203 = vmax.f32 %v1131, 0.0
  %v1204 = vmax.f32 %v1133, 0.0
  %v1205 = vmax.f32 %v1137, 0.0
  %v1206 = vmax.f32 %v1139, 0.0
  %v1207 = vmax.f32 %v1141, 0.0
  %v1208 = vmax.f32 %v1143, 0.0
  %v1209 = vpack.c.bf16 %v1147, %v1145
  %v1210 = vpack.c.bf16 %v1148, %v1146
  %v1211 = vpack.c.bf16 %v1151, %v1149
  %v1212 = vpack.c.bf16 %v1152, %v1150
  %v1213 = vpack.c.bf16 %v1155, %v1153
  %v1214 = vpack.c.bf16 %v1156, %v1154
  %v1215 = vpack.c.bf16 %v1159, %v1157
  %v1216 = vpack.c.bf16 %v1160, %v1158
  %v1217 = vpack.c.bf16 %v1163, %v1161
  %v1218 = vpack.c.bf16 %v1164, %v1162
  %v1219 = vpack.c.bf16 %v1167, %v1165
  %v1220 = vpack.c.bf16 %v1168, %v1166
  %v1221 = vpack.c.bf16 %v1171, %v1169
  %v1222 = vpack.c.bf16 %v1172, %v1170
  %v1223 = vpack.c.bf16 %v1175, %v1173
  %v1224 = vpack.c.bf16 %v1176, %v1174
  %v1225 = vpack.c.bf16 %v1179, %v1177
  %v1226 = vpack.c.bf16 %v1180, %v1178
  %v1227 = vpack.c.bf16 %v1183, %v1181
  %v1228 = vpack.c.bf16 %v1184, %v1182
  %v1229 = vpack.c.bf16 %v1187, %v1185
  %v1230 = vpack.c.bf16 %v1188, %v1186
  %v1231 = vpack.c.bf16 %v1191, %v1189
  %v1232 = vpack.c.bf16 %v1192, %v1190
  %v1233 = vpack.c.bf16 %v1195, %v1193
  %v1234 = vpack.c.bf16 %v1196, %v1194
  %v1235 = vpack.c.bf16 %v1199, %v1197
  %v1236 = vpack.c.bf16 %v1200, %v1198
  %v1237 = vpack.c.bf16 %v1203, %v1201
  %v1238 = vpack.c.bf16 %v1204, %v1202
  %v1239 = vpack.c.bf16 %v1207, %v1205
  %v1240 = vpack.c.bf16 %v1208, %v1206
  %v1241 = vld [vmem:[%s5] sm:$0xff]
  %v1242 = vld [vmem:[%s5 + $0x8] sm:$0xff]
  %v1243 = vld [vmem:[%s5 + $0x10] sm:$0xff]
  %v1244 = vld [vmem:[%s5 + $0x18] sm:$0xff]
  %v1245 = vld [vmem:[%s5 + $0x20] sm:$0xff]
  %v1246 = vld [vmem:[%s5 + $0x28] sm:$0xff]
  %v1247 = vld [vmem:[%s5 + $0x30] sm:$0xff]
  %v1248 = vld [vmem:[%s5 + $0x38] sm:$0xff]
  %v1249 = vld [vmem:[%s5 + $0x40] sm:$0xff]
  %v1250 = vld [vmem:[%s5 + $0x48] sm:$0xff]
  %v1251 = vld [vmem:[%s5 + $0x50] sm:$0xff]
  %v1252 = vld [vmem:[%s5 + $0x58] sm:$0xff]
  %v1253 = vld [vmem:[%s5 + $0x60] sm:$0xff]
  %v1254 = vld [vmem:[%s5 + $0x68] sm:$0xff]
  %v1255 = vld [vmem:[%s5 + $0x70] sm:$0xff]
  %v1256 = vld [vmem:[%s5 + $0x78] sm:$0xff]
  %v1257 = vld [vmem:[%s5 + $0x80] sm:$0xff]
  %v1258 = vld [vmem:[%s5 + $0x88] sm:$0xff]
  %v1259 = vld [vmem:[%s5 + $0x90] sm:$0xff]
  %v1260 = vld [vmem:[%s5 + $0x98] sm:$0xff]
  %v1261 = vld [vmem:[%s5 + $0xa0] sm:$0xff]
  %v1262 = vld [vmem:[%s5 + $0xa8] sm:$0xff]
  %v1263 = vld [vmem:[%s5 + $0xb0] sm:$0xff]
  %v1264 = vld [vmem:[%s5 + $0xb8] sm:$0xff]
  %v1265 = vld [vmem:[%s5 + $0xc0] sm:$0xff]
  %v1266 = vld [vmem:[%s5 + $0xc8] sm:$0xff]
  %v1267 = vld [vmem:[%s5 + $0xd0] sm:$0xff]
  %v1268 = vld [vmem:[%s5 + $0xd8] sm:$0xff]
  %v1269 = vld [vmem:[%s5 + $0xe0] sm:$0xff]
  %v1270 = vld [vmem:[%s5 + $0xe8] sm:$0xff]
  %v1271 = vld [vmem:[%s5 + $0xf0] sm:$0xff]
  %v1272 = vld [vmem:[%s5 + $0xf8] sm:$0xff]
  %v1273 = vld [vmem:[%s6] sm:$0x1]
  %v1306 = vunpack.c.l.b16 %v1241
  %v1307 = vunpack.c.h.b16 %v1241
  %v1308 = vunpack.c.l.b16 %v1242
  %v1309 = vunpack.c.h.b16 %v1242
  %v1310 = vunpack.c.l.b16 %v1243
  %v1311 = vunpack.c.h.b16 %v1243
  %v1312 = vunpack.c.l.b16 %v1244
  %v1313 = vunpack.c.h.b16 %v1244
  %v1314 = vunpack.c.l.b16 %v1245
  %v1315 = vunpack.c.h.b16 %v1245
  %v1316 = vunpack.c.l.b16 %v1246
  %v1317 = vunpack.c.h.b16 %v1246
  %v1318 = vunpack.c.l.b16 %v1247
  %v1319 = vunpack.c.h.b16 %v1247
  %v1320 = vunpack.c.l.b16 %v1248
  %v1321 = vunpack.c.h.b16 %v1248
  %v1322 = vunpack.c.l.b16 %v1249
  %v1323 = vunpack.c.h.b16 %v1249
  %v1324 = vunpack.c.l.b16 %v1250
  %v1325 = vunpack.c.h.b16 %v1250
  %v1326 = vunpack.c.l.b16 %v1251
  %v1327 = vunpack.c.h.b16 %v1251
  %v1328 = vunpack.c.l.b16 %v1252
  %v1329 = vunpack.c.h.b16 %v1252
  %v1330 = vunpack.c.l.b16 %v1253
  %v1331 = vunpack.c.h.b16 %v1253
  %v1332 = vunpack.c.l.b16 %v1254
  %v1333 = vunpack.c.h.b16 %v1254
  %v1334 = vunpack.c.l.b16 %v1255
  %v1335 = vunpack.c.h.b16 %v1255
  %v1336 = vunpack.c.l.b16 %v1256
  %v1337 = vunpack.c.h.b16 %v1256
  %v1338 = vunpack.c.l.b16 %v1257
  %v1339 = vunpack.c.h.b16 %v1257
  %v1340 = vunpack.c.l.b16 %v1258
  %v1341 = vunpack.c.h.b16 %v1258
  %v1342 = vunpack.c.l.b16 %v1259
  %v1343 = vunpack.c.h.b16 %v1259
  %v1344 = vunpack.c.l.b16 %v1260
  %v1345 = vunpack.c.h.b16 %v1260
  %v1346 = vunpack.c.l.b16 %v1261
  %v1347 = vunpack.c.h.b16 %v1261
  %v1348 = vunpack.c.l.b16 %v1262
  %v1349 = vunpack.c.h.b16 %v1262
  %v1350 = vunpack.c.l.b16 %v1263
  %v1351 = vunpack.c.h.b16 %v1263
  %v1352 = vunpack.c.l.b16 %v1264
  %v1353 = vunpack.c.h.b16 %v1264
  %v1354 = vunpack.c.l.b16 %v1265
  %v1355 = vunpack.c.h.b16 %v1265
  %v1356 = vunpack.c.l.b16 %v1266
  %v1357 = vunpack.c.h.b16 %v1266
  %v1358 = vunpack.c.l.b16 %v1267
  %v1359 = vunpack.c.h.b16 %v1267
  %v1360 = vunpack.c.l.b16 %v1268
  %v1361 = vunpack.c.h.b16 %v1268
  %v1362 = vunpack.c.l.b16 %v1269
  %v1363 = vunpack.c.h.b16 %v1269
  %v1364 = vunpack.c.l.b16 %v1270
  %v1365 = vunpack.c.h.b16 %v1270
  %v1366 = vunpack.c.l.b16 %v1271
  %v1367 = vunpack.c.h.b16 %v1271
  %v1368 = vunpack.c.l.b16 %v1272
  %v1369 = vunpack.c.h.b16 %v1272
  %v1370 = vpack.c.b16 %v1308, %v1306
  %v1371 = vpack.c.b16 %v1309, %v1307
  %v1372 = vpack.c.b16 %v1312, %v1310
  %v1373 = vpack.c.b16 %v1313, %v1311
  %v1374 = vpack.c.b16 %v1316, %v1314
  %v1375 = vpack.c.b16 %v1317, %v1315
  %v1376 = vpack.c.b16 %v1320, %v1318
  %v1377 = vpack.c.b16 %v1321, %v1319
  %v1378 = vpack.c.b16 %v1324, %v1322
  %v1379 = vpack.c.b16 %v1325, %v1323
  %v1380 = vpack.c.b16 %v1328, %v1326
  %v1381 = vpack.c.b16 %v1329, %v1327
  %v1382 = vpack.c.b16 %v1332, %v1330
  %v1383 = vpack.c.b16 %v1333, %v1331
  %v1384 = vpack.c.b16 %v1336, %v1334
  %v1385 = vpack.c.b16 %v1337, %v1335
  %v1386 = vpack.c.b16 %v1340, %v1338
  %v1387 = vpack.c.b16 %v1341, %v1339
  %v1388 = vpack.c.b16 %v1344, %v1342
  %v1389 = vpack.c.b16 %v1345, %v1343
  %v1390 = vpack.c.b16 %v1348, %v1346
  %v1391 = vpack.c.b16 %v1349, %v1347
  %v1392 = vpack.c.b16 %v1352, %v1350
  %v1393 = vpack.c.b16 %v1353, %v1351
  %v1394 = vpack.c.b16 %v1356, %v1354
  %v1395 = vpack.c.b16 %v1357, %v1355
  %v1396 = vpack.c.b16 %v1360, %v1358
  %v1397 = vpack.c.b16 %v1361, %v1359
  %v1398 = vpack.c.b16 %v1364, %v1362
  %v1399 = vpack.c.b16 %v1365, %v1363
  %v1400 = vpack.c.b16 %v1368, %v1366
  %v1401 = vpack.c.b16 %v1369, %v1367
  %1434 = vmatprep.subr.bf16.mxu0 %v1385
  %1435 = vmatpush1.bf16.msra.mxu0 %v1384
  %1436 = vmatprep.subr.bf16.mxu0 %v1383
  %1437 = vmatpush1.bf16.msra.mxu0 %v1382
  %1438 = vmatprep.subr.bf16.mxu0 %v1381
  %1439 = vmatpush1.bf16.msra.mxu0 %v1380
  %1440 = vmatprep.subr.bf16.mxu0 %v1379
  %1441 = vmatpush1.bf16.msra.mxu0 %v1378
  %1442 = vmatprep.subr.bf16.mxu0 %v1377
  %1443 = vmatpush1.bf16.msra.mxu0 %v1376
  %1444 = vmatprep.subr.bf16.mxu0 %v1375
  %1445 = vmatpush1.bf16.msra.mxu0 %v1374
  %1446 = vmatprep.subr.bf16.mxu0 %v1373
  %1447 = vmatpush1.bf16.msra.mxu0 %v1372
  %1448 = vmatprep.subr.bf16.mxu0 %v1371
  %1449 = vmatpush1.bf16.msra.mxu0 %v1370
  %1450 = vmatprep.subr.bf16.mxu0 %v1401
  %1451 = vmatpush2.bf16.msra.mxu0 %v1400
  %1452 = vmatprep.subr.bf16.mxu0 %v1399
  %1453 = vmatpush2.bf16.msra.mxu0 %v1398
  %1454 = vmatprep.subr.bf16.mxu0 %v1397
  %1455 = vmatpush2.bf16.msra.mxu0 %v1396
  %1456 = vmatprep.subr.bf16.mxu0 %v1395
  %1457 = vmatpush2.bf16.msra.mxu0 %v1394
  %1458 = vmatprep.subr.bf16.mxu0 %v1393
  %1459 = vmatpush2.bf16.msra.mxu0 %v1392
  %1460 = vmatprep.subr.bf16.mxu0 %v1391
  %1461 = vmatpush2.bf16.msra.mxu0 %v1390
  %1462 = vmatprep.subr.bf16.mxu0 %v1389
  %1463 = vmatpush2.bf16.msra.mxu0 %v1388
  %1464 = vmatprep.subr.bf16.mxu0 %v1387
  %1465 = vmatpush2.bf16.msra.mxu0 %v1386
  %1466 = vmatprep.mubr.bf16.mxu0 %v1210
  %1467 = vmatmul.mubr.bf16.gmra.mxu0 %v1209
  %v1468 = vpop.f32.mrf.mxu0
  %v1469 = vadd.f32 0.0, %v1468
  %v1470 = vpop.f32.mrf.mxu0
  %v1471 = vadd.f32 0.0, %v1470
  %v1472 = vpop.f32.mrf.mxu0
  %v1473 = vadd.f32 0.0, %v1472
  %v1474 = vpop.f32.mrf.mxu0
  %v1475 = vadd.f32 0.0, %v1474
  %1476 = vmatprep.mubr.bf16.mxu0 %v1212
  %1477 = vmatmul.mubr.bf16.gmra.mxu0 %v1211
  %v1478 = vpop.f32.mrf.mxu0
  %v1479 = vadd.f32 0.0, %v1478
  %v1480 = vpop.f32.mrf.mxu0
  %v1481 = vadd.f32 0.0, %v1480
  %v1482 = vpop.f32.mrf.mxu0
  %v1483 = vadd.f32 0.0, %v1482
  %v1484 = vpop.f32.mrf.mxu0
  %v1485 = vadd.f32 0.0, %v1484
  %1486 = vmatprep.mubr.bf16.mxu0 %v1214
  %1487 = vmatmul.mubr.bf16.gmra.mxu0 %v1213
  %v1488 = vpop.f32.mrf.mxu0
  %v1489 = vadd.f32 0.0, %v1488
  %v1490 = vpop.f32.mrf.mxu0
  %v1491 = vadd.f32 0.0, %v1490
  %v1492 = vpop.f32.mrf.mxu0
  %v1493 = vadd.f32 0.0, %v1492
  %v1494 = vpop.f32.mrf.mxu0
  %v1495 = vadd.f32 0.0, %v1494
  %1496 = vmatprep.mubr.bf16.mxu0 %v1216
  %1497 = vmatmul.mubr.bf16.gmra.mxu0 %v1215
  %v1498 = vpop.f32.mrf.mxu0
  %v1499 = vadd.f32 0.0, %v1498
  %v1500 = vpop.f32.mrf.mxu0
  %v1501 = vadd.f32 0.0, %v1500
  %v1502 = vpop.f32.mrf.mxu0
  %v1503 = vadd.f32 0.0, %v1502
  %v1504 = vpop.f32.mrf.mxu0
  %v1505 = vadd.f32 0.0, %v1504
  %1506 = vmatprep.mubr.bf16.mxu0 %v1218
  %1507 = vmatmul.mubr.bf16.gmra.mxu0 %v1217
  %v1508 = vpop.f32.mrf.mxu0
  %v1509 = vadd.f32 0.0, %v1508
  %v1510 = vpop.f32.mrf.mxu0
  %v1511 = vadd.f32 0.0, %v1510
  %v1512 = vpop.f32.mrf.mxu0
  %v1513 = vadd.f32 0.0, %v1512
  %v1514 = vpop.f32.mrf.mxu0
  %v1515 = vadd.f32 0.0, %v1514
  %1516 = vmatprep.mubr.bf16.mxu0 %v1220
  %1517 = vmatmul.mubr.bf16.gmra.mxu0 %v1219
  %v1518 = vpop.f32.mrf.mxu0
  %v1519 = vadd.f32 0.0, %v1518
  %v1520 = vpop.f32.mrf.mxu0
  %v1521 = vadd.f32 0.0, %v1520
  %v1522 = vpop.f32.mrf.mxu0
  %v1523 = vadd.f32 0.0, %v1522
  %v1524 = vpop.f32.mrf.mxu0
  %v1525 = vadd.f32 0.0, %v1524
  %1526 = vmatprep.mubr.bf16.mxu0 %v1222
  %1527 = vmatmul.mubr.bf16.gmra.mxu0 %v1221
  %v1528 = vpop.f32.mrf.mxu0
  %v1529 = vadd.f32 0.0, %v1528
  %v1530 = vpop.f32.mrf.mxu0
  %v1531 = vadd.f32 0.0, %v1530
  %v1532 = vpop.f32.mrf.mxu0
  %v1533 = vadd.f32 0.0, %v1532
  %v1534 = vpop.f32.mrf.mxu0
  %v1535 = vadd.f32 0.0, %v1534
  %1536 = vmatprep.mubr.bf16.mxu0 %v1224
  %1537 = vmatmul.mubr.bf16.gmra.mxu0 %v1223
  %v1538 = vpop.f32.mrf.mxu0
  %v1539 = vadd.f32 0.0, %v1538
  %v1540 = vpop.f32.mrf.mxu0
  %v1541 = vadd.f32 0.0, %v1540
  %v1542 = vpop.f32.mrf.mxu0
  %v1543 = vadd.f32 0.0, %v1542
  %v1544 = vpop.f32.mrf.mxu0
  %v1545 = vadd.f32 0.0, %v1544
  %1546 = vmatprep.mubr.bf16.mxu0 %v1226
  %1547 = vmatmul.mubr.bf16.gmra.mxu0 %v1225
  %v1548 = vpop.f32.mrf.mxu0
  %v1549 = vadd.f32 0.0, %v1548
  %v1550 = vpop.f32.mrf.mxu0
  %v1551 = vadd.f32 0.0, %v1550
  %v1552 = vpop.f32.mrf.mxu0
  %v1553 = vadd.f32 0.0, %v1552
  %v1554 = vpop.f32.mrf.mxu0
  %v1555 = vadd.f32 0.0, %v1554
  %1556 = vmatprep.mubr.bf16.mxu0 %v1228
  %1557 = vmatmul.mubr.bf16.gmra.mxu0 %v1227
  %v1558 = vpop.f32.mrf.mxu0
  %v1559 = vadd.f32 0.0, %v1558
  %v1560 = vpop.f32.mrf.mxu0
  %v1561 = vadd.f32 0.0, %v1560
  %v1562 = vpop.f32.mrf.mxu0
  %v1563 = vadd.f32 0.0, %v1562
  %v1564 = vpop.f32.mrf.mxu0
  %v1565 = vadd.f32 0.0, %v1564
  %1566 = vmatprep.mubr.bf16.mxu0 %v1230
  %1567 = vmatmul.mubr.bf16.gmra.mxu0 %v1229
  %v1568 = vpop.f32.mrf.mxu0
  %v1569 = vadd.f32 0.0, %v1568
  %v1570 = vpop.f32.mrf.mxu0
  %v1571 = vadd.f32 0.0, %v1570
  %v1572 = vpop.f32.mrf.mxu0
  %v1573 = vadd.f32 0.0, %v1572
  %v1574 = vpop.f32.mrf.mxu0
  %v1575 = vadd.f32 0.0, %v1574
  %1576 = vmatprep.mubr.bf16.mxu0 %v1232
  %1577 = vmatmul.mubr.bf16.gmra.mxu0 %v1231
  %v1578 = vpop.f32.mrf.mxu0
  %v1579 = vadd.f32 0.0, %v1578
  %v1580 = vpop.f32.mrf.mxu0
  %v1581 = vadd.f32 0.0, %v1580
  %v1582 = vpop.f32.mrf.mxu0
  %v1583 = vadd.f32 0.0, %v1582
  %v1584 = vpop.f32.mrf.mxu0
  %v1585 = vadd.f32 0.0, %v1584
  %1586 = vmatprep.mubr.bf16.mxu0 %v1234
  %1587 = vmatmul.mubr.bf16.gmra.mxu0 %v1233
  %v1588 = vpop.f32.mrf.mxu0
  %v1589 = vadd.f32 0.0, %v1588
  %v1590 = vpop.f32.mrf.mxu0
  %v1591 = vadd.f32 0.0, %v1590
  %v1592 = vpop.f32.mrf.mxu0
  %v1593 = vadd.f32 0.0, %v1592
  %v1594 = vpop.f32.mrf.mxu0
  %v1595 = vadd.f32 0.0, %v1594
  %1596 = vmatprep.mubr.bf16.mxu0 %v1236
  %1597 = vmatmul.mubr.bf16.gmra.mxu0 %v1235
  %v1598 = vpop.f32.mrf.mxu0
  %v1599 = vadd.f32 0.0, %v1598
  %v1600 = vpop.f32.mrf.mxu0
  %v1601 = vadd.f32 0.0, %v1600
  %v1602 = vpop.f32.mrf.mxu0
  %v1603 = vadd.f32 0.0, %v1602
  %v1604 = vpop.f32.mrf.mxu0
  %v1605 = vadd.f32 0.0, %v1604
  %1606 = vmatprep.mubr.bf16.mxu0 %v1238
  %1607 = vmatmul.mubr.bf16.gmra.mxu0 %v1237
  %v1608 = vpop.f32.mrf.mxu0
  %v1609 = vadd.f32 0.0, %v1608
  %v1610 = vpop.f32.mrf.mxu0
  %v1611 = vadd.f32 0.0, %v1610
  %v1612 = vpop.f32.mrf.mxu0
  %v1613 = vadd.f32 0.0, %v1612
  %v1614 = vpop.f32.mrf.mxu0
  %v1615 = vadd.f32 0.0, %v1614
  %1616 = vmatprep.mubr.bf16.mxu0 %v1240
  %1617 = vmatmul.mubr.bf16.gmra.mxu0 %v1239
  %v1618 = vpop.f32.mrf.mxu0
  %v1619 = vadd.f32 0.0, %v1618
  %v1620 = vpop.f32.mrf.mxu0
  %v1621 = vadd.f32 0.0, %v1620
  %v1622 = vpop.f32.mrf.mxu0
  %v1623 = vadd.f32 0.0, %v1622
  %v1624 = vpop.f32.mrf.mxu0
  %v1625 = vadd.f32 0.0, %v1624
  %1626 = vdwg.mxu0
  %v1627 = vpack.c.bf16 %v1473, %v1469
  %v1628 = vpack.c.bf16 %v1483, %v1479
  %v1629 = vpack.c.bf16 %v1493, %v1489
  %v1630 = vpack.c.bf16 %v1503, %v1499
  %v1631 = vpack.c.bf16 %v1513, %v1509
  %v1632 = vpack.c.bf16 %v1523, %v1519
  %v1633 = vpack.c.bf16 %v1533, %v1529
  %v1634 = vpack.c.bf16 %v1543, %v1539
  %v1635 = vpack.c.bf16 %v1553, %v1549
  %v1636 = vpack.c.bf16 %v1563, %v1559
  %v1637 = vpack.c.bf16 %v1573, %v1569
  %v1638 = vpack.c.bf16 %v1583, %v1579
  %v1639 = vpack.c.bf16 %v1593, %v1589
  %v1640 = vpack.c.bf16 %v1603, %v1599
  %v1641 = vpack.c.bf16 %v1613, %v1609
  %v1642 = vpack.c.bf16 %v1623, %v1619
  %1643 = vmatprep.subr.bf16.mxu0 0
  %1644 = vmatpush1.bf16.msra.mxu0 %v1634
  %1645 = vmatprep.subr.bf16.mxu0 0
  %1646 = vmatpush1.bf16.msra.mxu0 %v1633
  %1647 = vmatprep.subr.bf16.mxu0 0
  %1648 = vmatpush1.bf16.msra.mxu0 %v1632
  %1649 = vmatprep.subr.bf16.mxu0 0
  %1650 = vmatpush1.bf16.msra.mxu0 %v1631
  %1651 = vmatprep.subr.bf16.mxu0 0
  %1652 = vmatpush1.bf16.msra.mxu0 %v1630
  %1653 = vmatprep.subr.bf16.mxu0 0
  %1654 = vmatpush1.bf16.msra.mxu0 %v1629
  %1655 = vmatprep.subr.bf16.mxu0 0
  %1656 = vmatpush1.bf16.msra.mxu0 %v1628
  %1657 = vmatprep.subr.bf16.mxu0 0
  %1658 = vmatpush1.bf16.msra.mxu0 %v1627
  %1659 = vmatprep.subr.bf16.mxu0 0
  %1660 = vmatpush2.bf16.msra.mxu0 %v1642
  %1661 = vmatprep.subr.bf16.mxu0 0
  %1662 = vmatpush2.bf16.msra.mxu0 %v1641
  %1663 = vmatprep.subr.bf16.mxu0 0
  %1664 = vmatpush2.bf16.msra.mxu0 %v1640
  %1665 = vmatprep.subr.bf16.mxu0 0
  %1666 = vmatpush2.bf16.msra.mxu0 %v1639
  %1667 = vmatprep.subr.bf16.mxu0 0
  %1668 = vmatpush2.bf16.msra.mxu0 %v1638
  %1669 = vmatprep.subr.bf16.mxu0 0
  %1670 = vmatpush2.bf16.msra.mxu0 %v1637
  %1671 = vmatprep.subr.bf16.mxu0 0
  %1672 = vmatpush2.bf16.msra.mxu0 %v1636
  %1673 = vmatprep.subr.bf16.mxu0 0
  %1674 = vmatpush2.bf16.msra.mxu0 %v1635
  %1675 = vmatprep.mubr.bf16.mxu0 %v253
  %1676 = vmatmul.mubr.bf16.gmra.mxu0 %v252
  %v1677 = vpop.f32.mrf.mxu0
  %v1678 = vadd.f32 0.0, %v1677
  %v1679 = vpop.f32.mrf.mxu0
  %v1680 = vpop.f32.mrf.mxu0
  %v1681 = vadd.f32 0.0, %v1680
  %v1682 = vpop.f32.mrf.mxu0
  %1683 = vmatprep.mubr.bf16.mxu0 %v255
  %1684 = vmatmul.mubr.bf16.gmra.mxu0 %v254
  %v1685 = vpop.f32.mrf.mxu0
  %v1686 = vadd.f32 0.0, %v1685
  %v1687 = vpop.f32.mrf.mxu0
  %v1688 = vpop.f32.mrf.mxu0
  %v1689 = vadd.f32 0.0, %v1688
  %v1690 = vpop.f32.mrf.mxu0
  %1691 = vmatprep.mubr.bf16.mxu0 %v257
  %1692 = vmatmul.mubr.bf16.gmra.mxu0 %v256
  %v1693 = vpop.f32.mrf.mxu0
  %v1694 = vadd.f32 0.0, %v1693
  %v1695 = vpop.f32.mrf.mxu0
  %v1696 = vpop.f32.mrf.mxu0
  %v1697 = vadd.f32 0.0, %v1696
  %v1698 = vpop.f32.mrf.mxu0
  %1699 = vmatprep.mubr.bf16.mxu0 %v259
  %1700 = vmatmul.mubr.bf16.gmra.mxu0 %v258
  %v1701 = vpop.f32.mrf.mxu0
  %v1702 = vadd.f32 0.0, %v1701
  %v1703 = vpop.f32.mrf.mxu0
  %v1704 = vpop.f32.mrf.mxu0
  %v1705 = vadd.f32 0.0, %v1704
  %v1706 = vpop.f32.mrf.mxu0
  %1707 = vmatprep.mubr.bf16.mxu0 %v261
  %1708 = vmatmul.mubr.bf16.gmra.mxu0 %v260
  %v1709 = vpop.f32.mrf.mxu0
  %v1710 = vadd.f32 0.0, %v1709
  %v1711 = vpop.f32.mrf.mxu0
  %v1712 = vpop.f32.mrf.mxu0
  %v1713 = vadd.f32 0.0, %v1712
  %v1714 = vpop.f32.mrf.mxu0
  %1715 = vmatprep.mubr.bf16.mxu0 %v263
  %1716 = vmatmul.mubr.bf16.gmra.mxu0 %v262
  %v1717 = vpop.f32.mrf.mxu0
  %v1718 = vadd.f32 0.0, %v1717
  %v1719 = vpop.f32.mrf.mxu0
  %v1720 = vpop.f32.mrf.mxu0
  %v1721 = vadd.f32 0.0, %v1720
  %v1722 = vpop.f32.mrf.mxu0
  %1723 = vmatprep.mubr.bf16.mxu0 %v265
  %1724 = vmatmul.mubr.bf16.gmra.mxu0 %v264
  %v1725 = vpop.f32.mrf.mxu0
  %v1726 = vadd.f32 0.0, %v1725
  %v1727 = vpop.f32.mrf.mxu0
  %v1728 = vpop.f32.mrf.mxu0
  %v1729 = vadd.f32 0.0, %v1728
  %v1730 = vpop.f32.mrf.mxu0
  %1731 = vmatprep.mubr.bf16.mxu0 %v267
  %1732 = vmatmul.mubr.bf16.gmra.mxu0 %v266
  %v1733 = vpop.f32.mrf.mxu0
  %v1734 = vadd.f32 0.0, %v1733
  %v1735 = vpop.f32.mrf.mxu0
  %v1736 = vpop.f32.mrf.mxu0
  %v1737 = vadd.f32 0.0, %v1736
  %v1738 = vpop.f32.mrf.mxu0
  %1739 = vmatprep.mubr.bf16.mxu0 %v269
  %1740 = vmatmul.mubr.bf16.gmra.mxu0 %v268
  %v1741 = vpop.f32.mrf.mxu0
  %v1742 = vadd.f32 0.0, %v1741
  %v1743 = vpop.f32.mrf.mxu0
  %v1744 = vpop.f32.mrf.mxu0
  %v1745 = vadd.f32 0.0, %v1744
  %v1746 = vpop.f32.mrf.mxu0
  %1747 = vmatprep.mubr.bf16.mxu0 %v271
  %1748 = vmatmul.mubr.bf16.gmra.mxu0 %v270
  %v1749 = vpop.f32.mrf.mxu0
  %v1750 = vadd.f32 0.0, %v1749
  %v1751 = vpop.f32.mrf.mxu0
  %v1752 = vpop.f32.mrf.mxu0
  %v1753 = vadd.f32 0.0, %v1752
  %v1754 = vpop.f32.mrf.mxu0
  %1755 = vmatprep.mubr.bf16.mxu0 %v273
  %1756 = vmatmul.mubr.bf16.gmra.mxu0 %v272
  %v1757 = vpop.f32.mrf.mxu0
  %v1758 = vadd.f32 0.0, %v1757
  %v1759 = vpop.f32.mrf.mxu0
  %v1760 = vpop.f32.mrf.mxu0
  %v1761 = vadd.f32 0.0, %v1760
  %v1762 = vpop.f32.mrf.mxu0
  %1763 = vmatprep.mubr.bf16.mxu0 %v275
  %1764 = vmatmul.mubr.bf16.gmra.mxu0 %v274
  %v1765 = vpop.f32.mrf.mxu0
  %v1766 = vadd.f32 0.0, %v1765
  %v1767 = vpop.f32.mrf.mxu0
  %v1768 = vpop.f32.mrf.mxu0
  %v1769 = vadd.f32 0.0, %v1768
  %v1770 = vpop.f32.mrf.mxu0
  %1771 = vmatprep.mubr.bf16.mxu0 %v277
  %1772 = vmatmul.mubr.bf16.gmra.mxu0 %v276
  %v1773 = vpop.f32.mrf.mxu0
  %v1774 = vadd.f32 0.0, %v1773
  %v1775 = vpop.f32.mrf.mxu0
  %v1776 = vpop.f32.mrf.mxu0
  %v1777 = vadd.f32 0.0, %v1776
  %v1778 = vpop.f32.mrf.mxu0
  %1779 = vmatprep.mubr.bf16.mxu0 %v279
  %1780 = vmatmul.mubr.bf16.gmra.mxu0 %v278
  %v1781 = vpop.f32.mrf.mxu0
  %v1782 = vadd.f32 0.0, %v1781
  %v1783 = vpop.f32.mrf.mxu0
  %v1784 = vpop.f32.mrf.mxu0
  %v1785 = vadd.f32 0.0, %v1784
  %v1786 = vpop.f32.mrf.mxu0
  %1787 = vmatprep.mubr.bf16.mxu0 %v281
  %1788 = vmatmul.mubr.bf16.gmra.mxu0 %v280
  %v1789 = vpop.f32.mrf.mxu0
  %v1790 = vadd.f32 0.0, %v1789
  %v1791 = vpop.f32.mrf.mxu0
  %v1792 = vpop.f32.mrf.mxu0
  %v1793 = vadd.f32 0.0, %v1792
  %v1794 = vpop.f32.mrf.mxu0
  %1795 = vmatprep.mubr.bf16.mxu0 %v283
  %1796 = vmatmul.mubr.bf16.gmra.mxu0 %v282
  %v1797 = vpop.f32.mrf.mxu0
  %v1798 = vadd.f32 0.0, %v1797
  %v1799 = vpop.f32.mrf.mxu0
  %v1800 = vpop.f32.mrf.mxu0
  %v1801 = vadd.f32 0.0, %v1800
  %v1802 = vpop.f32.mrf.mxu0
  %1803 = vdwg.mxu0
  %v1804 = vmul.f32 %v1678, %v576
  %v1805 = vmul.f32 %v1681, %v581
  %v1806 = vmul.f32 %v1686, %v586
  %v1807 = vmul.f32 %v1689, %v591
  %v1808 = vmul.f32 %v1694, %v596
  %v1809 = vmul.f32 %v1697, %v601
  %v1810 = vmul.f32 %v1702, %v606
  %v1811 = vmul.f32 %v1705, %v611
  %v1812 = vmul.f32 %v1710, %v616
  %v1813 = vmul.f32 %v1713, %v621
  %v1814 = vmul.f32 %v1718, %v626
  %v1815 = vmul.f32 %v1721, %v631
  %v1816 = vmul.f32 %v1726, %v636
  %v1817 = vmul.f32 %v1729, %v641
  %v1818 = vmul.f32 %v1734, %v646
  %v1819 = vmul.f32 %v1737, %v651
  %v1820 = vmul.f32 %v1742, %v656
  %v1821 = vmul.f32 %v1745, %v661
  %v1822 = vmul.f32 %v1750, %v666
  %v1823 = vmul.f32 %v1753, %v671
  %v1824 = vmul.f32 %v1758, %v676
  %v1825 = vmul.f32 %v1761, %v681
  %v1826 = vmul.f32 %v1766, %v686
  %v1827 = vmul.f32 %v1769, %v691
  %v1828 = vmul.f32 %v1774, %v696
  %v1829 = vmul.f32 %v1777, %v701
  %v1830 = vmul.f32 %v1782, %v706
  %v1831 = vmul.f32 %v1785, %v711
  %v1832 = vmul.f32 %v1790, %v716
  %v1833 = vmul.f32 %v1793, %v721
  %v1834 = vmul.f32 %v1798, %v726
  %v1835 = vmul.f32 %v1801, %v731
  %v1836 = vadd.f32 %v1804, %v1471
  %v1837 = vadd.f32 %v1805, %v1475
  %v1838 = vadd.f32 %v1806, %v1481
  %v1839 = vadd.f32 %v1807, %v1485
  %v1840 = vadd.f32 %v1808, %v1491
  %v1841 = vadd.f32 %v1809, %v1495
  %v1842 = vadd.f32 %v1810, %v1501
  %v1843 = vadd.f32 %v1811, %v1505
  %v1844 = vadd.f32 %v1812, %v1511
  %v1845 = vadd.f32 %v1813, %v1515
  %v1846 = vadd.f32 %v1814, %v1521
  %v1847 = vadd.f32 %v1815, %v1525
  %v1848 = vadd.f32 %v1816, %v1531
  %v1849 = vadd.f32 %v1817, %v1535
  %v1850 = vadd.f32 %v1818, %v1541
  %v1851 = vadd.f32 %v1819, %v1545
  %v1852 = vadd.f32 %v1820, %v1551
  %v1853 = vadd.f32 %v1821, %v1555
  %v1854 = vadd.f32 %v1822, %v1561
  %v1855 = vadd.f32 %v1823, %v1565
  %v1856 = vadd.f32 %v1824, %v1571
  %v1857 = vadd.f32 %v1825, %v1575
  %v1858 = vadd.f32 %v1826, %v1581
  %v1859 = vadd.f32 %v1827, %v1585
  %v1860 = vadd.f32 %v1828, %v1591
  %v1861 = vadd.f32 %v1829, %v1595
  %v1862 = vadd.f32 %v1830, %v1601
  %v1863 = vadd.f32 %v1831, %v1605
  %v1864 = vadd.f32 %v1832, %v1611
  %v1865 = vadd.f32 %v1833, %v1615
  %v1866 = vadd.f32 %v1834, %v1621
  %v1867 = vadd.f32 %v1835, %v1625
  %v1869 = vlaneseq
  %v1870 = vshrl.u32 %v1869, 7
  %v1871 = vsub.s32 0, %v1870
  %v1872 = vrot.slane %v1273, %v1871
  %v1874 = vadd.f32 %v1836, %v1872
  %v1875 = vadd.f32 %v1837, %v1872
  %v1876 = vadd.f32 %v1838, %v1872
  %v1877 = vadd.f32 %v1839, %v1872
  %v1878 = vadd.f32 %v1840, %v1872
  %v1879 = vadd.f32 %v1841, %v1872
  %v1880 = vadd.f32 %v1842, %v1872
  %v1881 = vadd.f32 %v1843, %v1872
  %v1882 = vadd.f32 %v1844, %v1872
  %v1883 = vadd.f32 %v1845, %v1872
  %v1884 = vadd.f32 %v1846, %v1872
  %v1885 = vadd.f32 %v1847, %v1872
  %v1886 = vadd.f32 %v1848, %v1872
  %v1887 = vadd.f32 %v1849, %v1872
  %v1888 = vadd.f32 %v1850, %v1872
  %v1889 = vadd.f32 %v1851, %v1872
  %v1890 = vadd.f32 %v1852, %v1872
  %v1891 = vadd.f32 %v1853, %v1872
  %v1892 = vadd.f32 %v1854, %v1872
  %v1893 = vadd.f32 %v1855, %v1872
  %v1894 = vadd.f32 %v1856, %v1872
  %v1895 = vadd.f32 %v1857, %v1872
  %v1896 = vadd.f32 %v1858, %v1872
  %v1897 = vadd.f32 %v1859, %v1872
  %v1898 = vadd.f32 %v1860, %v1872
  %v1899 = vadd.f32 %v1861, %v1872
  %v1900 = vadd.f32 %v1862, %v1872
  %v1901 = vadd.f32 %v1863, %v1872
  %v1902 = vadd.f32 %v1864, %v1872
  %v1903 = vadd.f32 %v1865, %v1872
  %v1904 = vadd.f32 %v1866, %v1872
  %v1905 = vadd.f32 %v1867, %v1872
  %1906 = vmax.xlane.f32.xlu0 %v1874
  %v1907 = vpop.xlane.xlu0 %1906
  %1908 = vmax.xlane.f32.xlu0 %v1875
  %v1909 = vpop.xlane.xlu0 %1908
  %1910 = vmax.xlane.f32.xlu0 %v1876
  %v1911 = vpop.xlane.xlu0 %1910
  %1912 = vmax.xlane.f32.xlu0 %v1877
  %v1913 = vpop.xlane.xlu0 %1912
  %1914 = vmax.xlane.f32.xlu0 %v1878
  %v1915 = vpop.xlane.xlu0 %1914
  %1916 = vmax.xlane.f32.xlu0 %v1879
  %v1917 = vpop.xlane.xlu0 %1916
  %1918 = vmax.xlane.f32.xlu0 %v1880
  %v1919 = vpop.xlane.xlu0 %1918
  %1920 = vmax.xlane.f32.xlu0 %v1881
  %v1921 = vpop.xlane.xlu0 %1920
  %1922 = vmax.xlane.f32.xlu0 %v1882
  %v1923 = vpop.xlane.xlu0 %1922
  %1924 = vmax.xlane.f32.xlu0 %v1883
  %v1925 = vpop.xlane.xlu0 %1924
  %1926 = vmax.xlane.f32.xlu0 %v1884
  %v1927 = vpop.xlane.xlu0 %1926
  %1928 = vmax.xlane.f32.xlu0 %v1885
  %v1929 = vpop.xlane.xlu0 %1928
  %1930 = vmax.xlane.f32.xlu0 %v1886
  %v1931 = vpop.xlane.xlu0 %1930
  %1932 = vmax.xlane.f32.xlu0 %v1887
  %v1933 = vpop.xlane.xlu0 %1932
  %1934 = vmax.xlane.f32.xlu0 %v1888
  %v1935 = vpop.xlane.xlu0 %1934
  %1936 = vmax.xlane.f32.xlu0 %v1889
  %v1937 = vpop.xlane.xlu0 %1936
  %1938 = vmax.xlane.f32.xlu0 %v1890
  %v1939 = vpop.xlane.xlu0 %1938
  %1940 = vmax.xlane.f32.xlu0 %v1891
  %v1941 = vpop.xlane.xlu0 %1940
  %1942 = vmax.xlane.f32.xlu0 %v1892
  %v1943 = vpop.xlane.xlu0 %1942
  %1944 = vmax.xlane.f32.xlu0 %v1893
  %v1945 = vpop.xlane.xlu0 %1944
  %1946 = vmax.xlane.f32.xlu0 %v1894
  %v1947 = vpop.xlane.xlu0 %1946
  %1948 = vmax.xlane.f32.xlu0 %v1895
  %v1949 = vpop.xlane.xlu0 %1948
  %1950 = vmax.xlane.f32.xlu0 %v1896
  %v1951 = vpop.xlane.xlu0 %1950
  %1952 = vmax.xlane.f32.xlu0 %v1897
  %v1953 = vpop.xlane.xlu0 %1952
  %1954 = vmax.xlane.f32.xlu0 %v1898
  %v1955 = vpop.xlane.xlu0 %1954
  %1956 = vmax.xlane.f32.xlu0 %v1899
  %v1957 = vpop.xlane.xlu0 %1956
  %1958 = vmax.xlane.f32.xlu0 %v1900
  %v1959 = vpop.xlane.xlu0 %1958
  %1960 = vmax.xlane.f32.xlu0 %v1901
  %v1961 = vpop.xlane.xlu0 %1960
  %1962 = vmax.xlane.f32.xlu0 %v1902
  %v1963 = vpop.xlane.xlu0 %1962
  %1964 = vmax.xlane.f32.xlu0 %v1903
  %v1965 = vpop.xlane.xlu0 %1964
  %1966 = vmax.xlane.f32.xlu0 %v1904
  %v1967 = vpop.xlane.xlu0 %1966
  %1968 = vmax.xlane.f32.xlu0 %v1905
  %v1969 = vpop.xlane.xlu0 %1968
  %v1970 = vsub.f32 %v1874, %v1907
  %v1971 = vsub.f32 %v1875, %v1909
  %v1972 = vsub.f32 %v1876, %v1911
  %v1973 = vsub.f32 %v1877, %v1913
  %v1974 = vsub.f32 %v1878, %v1915
  %v1975 = vsub.f32 %v1879, %v1917
  %v1976 = vsub.f32 %v1880, %v1919
  %v1977 = vsub.f32 %v1881, %v1921
  %v1978 = vsub.f32 %v1882, %v1923
  %v1979 = vsub.f32 %v1883, %v1925
  %v1980 = vsub.f32 %v1884, %v1927
  %v1981 = vsub.f32 %v1885, %v1929
  %v1982 = vsub.f32 %v1886, %v1931
  %v1983 = vsub.f32 %v1887, %v1933
  %v1984 = vsub.f32 %v1888, %v1935
  %v1985 = vsub.f32 %v1889, %v1937
  %v1986 = vsub.f32 %v1890, %v1939
  %v1987 = vsub.f32 %v1891, %v1941
  %v1988 = vsub.f32 %v1892, %v1943
  %v1989 = vsub.f32 %v1893, %v1945
  %v1990 = vsub.f32 %v1894, %v1947
  %v1991 = vsub.f32 %v1895, %v1949
  %v1992 = vsub.f32 %v1896, %v1951
  %v1993 = vsub.f32 %v1897, %v1953
  %v1994 = vsub.f32 %v1898, %v1955
  %v1995 = vsub.f32 %v1899, %v1957
  %v1996 = vsub.f32 %v1900, %v1959
  %v1997 = vsub.f32 %v1901, %v1961
  %v1998 = vsub.f32 %v1902, %v1963
  %v1999 = vsub.f32 %v1903, %v1965
  %v2000 = vsub.f32 %v1904, %v1967
  %v2001 = vsub.f32 %v1905, %v1969
  %v2002 = vmul.f32 %v1970, 1.442695
  %v2003 = vpow.pop %v2002
  %v2004 = vmul.f32 %v1971, 1.442695
  %v2005 = vpow.pop %v2004
  %v2006 = vmul.f32 %v1972, 1.442695
  %v2007 = vpow.pop %v2006
  %v2008 = vmul.f32 %v1973, 1.442695
  %v2009 = vpow.pop %v2008
  %v2010 = vmul.f32 %v1974, 1.442695
  %v2011 = vpow.pop %v2010
  %v2012 = vmul.f32 %v1975, 1.442695
  %v2013 = vpow.pop %v2012
  %v2014 = vmul.f32 %v1976, 1.442695
  %v2015 = vpow.pop %v2014
  %v2016 = vmul.f32 %v1977, 1.442695
  %v2017 = vpow.pop %v2016
  %v2018 = vmul.f32 %v1978, 1.442695
  %v2019 = vpow.pop %v2018
  %v2020 = vmul.f32 %v1979, 1.442695
  %v2021 = vpow.pop %v2020
  %v2022 = vmul.f32 %v1980, 1.442695
  %v2023 = vpow.pop %v2022
  %v2024 = vmul.f32 %v1981, 1.442695
  %v2025 = vpow.pop %v2024
  %v2026 = vmul.f32 %v1982, 1.442695
  %v2027 = vpow.pop %v2026
  %v2028 = vmul.f32 %v1983, 1.442695
  %v2029 = vpow.pop %v2028
  %v2030 = vmul.f32 %v1984, 1.442695
  %v2031 = vpow.pop %v2030
  %v2032 = vmul.f32 %v1985, 1.442695
  %v2033 = vpow.pop %v2032
  %v2034 = vmul.f32 %v1986, 1.442695
  %v2035 = vpow.pop %v2034
  %v2036 = vmul.f32 %v1987, 1.442695
  %v2037 = vpow.pop %v2036
  %v2038 = vmul.f32 %v1988, 1.442695
  %v2039 = vpow.pop %v2038
  %v2040 = vmul.f32 %v1989, 1.442695
  %v2041 = vpow.pop %v2040
  %v2042 = vmul.f32 %v1990, 1.442695
  %v2043 = vpow.pop %v2042
  %v2044 = vmul.f32 %v1991, 1.442695
  %v2045 = vpow.pop %v2044
  %v2046 = vmul.f32 %v1992, 1.442695
  %v2047 = vpow.pop %v2046
  %v2048 = vmul.f32 %v1993, 1.442695
  %v2049 = vpow.pop %v2048
  %v2050 = vmul.f32 %v1994, 1.442695
  %v2051 = vpow.pop %v2050
  %v2052 = vmul.f32 %v1995, 1.442695
  %v2053 = vpow.pop %v2052
  %v2054 = vmul.f32 %v1996, 1.442695
  %v2055 = vpow.pop %v2054
  %v2056 = vmul.f32 %v1997, 1.442695
  %v2057 = vpow.pop %v2056
  %v2058 = vmul.f32 %v1998, 1.442695
  %v2059 = vpow.pop %v2058
  %v2060 = vmul.f32 %v1999, 1.442695
  %v2061 = vpow.pop %v2060
  %v2062 = vmul.f32 %v2000, 1.442695
  %v2063 = vpow.pop %v2062
  %v2064 = vmul.f32 %v2001, 1.442695
  %v2065 = vpow.pop %v2064
  %2066 = vadd.xlane.f32.xlu0 %v2003
  %v2067 = vpop.xlane.xlu0 %2066
  %2068 = vadd.xlane.f32.xlu0 %v2005
  %v2069 = vpop.xlane.xlu0 %2068
  %2070 = vadd.xlane.f32.xlu0 %v2007
  %v2071 = vpop.xlane.xlu0 %2070
  %2072 = vadd.xlane.f32.xlu0 %v2009
  %v2073 = vpop.xlane.xlu0 %2072
  %2074 = vadd.xlane.f32.xlu0 %v2011
  %v2075 = vpop.xlane.xlu0 %2074
  %2076 = vadd.xlane.f32.xlu0 %v2013
  %v2077 = vpop.xlane.xlu0 %2076
  %2078 = vadd.xlane.f32.xlu0 %v2015
  %v2079 = vpop.xlane.xlu0 %2078
  %2080 = vadd.xlane.f32.xlu0 %v2017
  %v2081 = vpop.xlane.xlu0 %2080
  %2082 = vadd.xlane.f32.xlu0 %v2019
  %v2083 = vpop.xlane.xlu0 %2082
  %2084 = vadd.xlane.f32.xlu0 %v2021
  %v2085 = vpop.xlane.xlu0 %2084
  %2086 = vadd.xlane.f32.xlu0 %v2023
  %v2087 = vpop.xlane.xlu0 %2086
  %2088 = vadd.xlane.f32.xlu0 %v2025
  %v2089 = vpop.xlane.xlu0 %2088
  %2090 = vadd.xlane.f32.xlu0 %v2027
  %v2091 = vpop.xlane.xlu0 %2090
  %2092 = vadd.xlane.f32.xlu0 %v2029
  %v2093 = vpop.xlane.xlu0 %2092
  %2094 = vadd.xlane.f32.xlu0 %v2031
  %v2095 = vpop.xlane.xlu0 %2094
  %2096 = vadd.xlane.f32.xlu0 %v2033
  %v2097 = vpop.xlane.xlu0 %2096
  %2098 = vadd.xlane.f32.xlu0 %v2035
  %v2099 = vpop.xlane.xlu0 %2098
  %2100 = vadd.xlane.f32.xlu0 %v2037
  %v2101 = vpop.xlane.xlu0 %2100
  %2102 = vadd.xlane.f32.xlu0 %v2039
  %v2103 = vpop.xlane.xlu0 %2102
  %2104 = vadd.xlane.f32.xlu0 %v2041
  %v2105 = vpop.xlane.xlu0 %2104
  %2106 = vadd.xlane.f32.xlu0 %v2043
  %v2107 = vpop.xlane.xlu0 %2106
  %2108 = vadd.xlane.f32.xlu0 %v2045
  %v2109 = vpop.xlane.xlu0 %2108
  %2110 = vadd.xlane.f32.xlu0 %v2047
  %v2111 = vpop.xlane.xlu0 %2110
  %2112 = vadd.xlane.f32.xlu0 %v2049
  %v2113 = vpop.xlane.xlu0 %2112
  %2114 = vadd.xlane.f32.xlu0 %v2051
  %v2115 = vpop.xlane.xlu0 %2114
  %2116 = vadd.xlane.f32.xlu0 %v2053
  %v2117 = vpop.xlane.xlu0 %2116
  %2118 = vadd.xlane.f32.xlu0 %v2055
  %v2119 = vpop.xlane.xlu0 %2118
  %2120 = vadd.xlane.f32.xlu0 %v2057
  %v2121 = vpop.xlane.xlu0 %2120
  %2122 = vadd.xlane.f32.xlu0 %v2059
  %v2123 = vpop.xlane.xlu0 %2122
  %2124 = vadd.xlane.f32.xlu0 %v2061
  %v2125 = vpop.xlane.xlu0 %2124
  %2126 = vadd.xlane.f32.xlu0 %v2063
  %v2127 = vpop.xlane.xlu0 %2126
  %2128 = vadd.xlane.f32.xlu0 %v2065
  %v2129 = vpop.xlane.xlu0 %2128
  %v2130 = vlog2.pop %v2067
  %v2131 = vmul.f32 %v2130, 0.6931472
  %v2132 = vlog2.pop %v2069
  %v2133 = vmul.f32 %v2132, 0.6931472
  %v2134 = vlog2.pop %v2071
  %v2135 = vmul.f32 %v2134, 0.6931472
  %v2136 = vlog2.pop %v2073
  %v2137 = vmul.f32 %v2136, 0.6931472
  %v2138 = vlog2.pop %v2075
  %v2139 = vmul.f32 %v2138, 0.6931472
  %v2140 = vlog2.pop %v2077
  %v2141 = vmul.f32 %v2140, 0.6931472
  %v2142 = vlog2.pop %v2079
  %v2143 = vmul.f32 %v2142, 0.6931472
  %v2144 = vlog2.pop %v2081
  %v2145 = vmul.f32 %v2144, 0.6931472
  %v2146 = vlog2.pop %v2083
  %v2147 = vmul.f32 %v2146, 0.6931472
  %v2148 = vlog2.pop %v2085
  %v2149 = vmul.f32 %v2148, 0.6931472
  %v2150 = vlog2.pop %v2087
  %v2151 = vmul.f32 %v2150, 0.6931472
  %v2152 = vlog2.pop %v2089
  %v2153 = vmul.f32 %v2152, 0.6931472
  %v2154 = vlog2.pop %v2091
  %v2155 = vmul.f32 %v2154, 0.6931472
  %v2156 = vlog2.pop %v2093
  %v2157 = vmul.f32 %v2156, 0.6931472
  %v2158 = vlog2.pop %v2095
  %v2159 = vmul.f32 %v2158, 0.6931472
  %v2160 = vlog2.pop %v2097
  %v2161 = vmul.f32 %v2160, 0.6931472
  %v2162 = vlog2.pop %v2099
  %v2163 = vmul.f32 %v2162, 0.6931472
  %v2164 = vlog2.pop %v2101
  %v2165 = vmul.f32 %v2164, 0.6931472
  %v2166 = vlog2.pop %v2103
  %v2167 = vmul.f32 %v2166, 0.6931472
  %v2168 = vlog2.pop %v2105
  %v2169 = vmul.f32 %v2168, 0.6931472
  %v2170 = vlog2.pop %v2107
  %v2171 = vmul.f32 %v2170, 0.6931472
  %v2172 = vlog2.pop %v2109
  %v2173 = vmul.f32 %v2172, 0.6931472
  %v2174 = vlog2.pop %v2111
  %v2175 = vmul.f32 %v2174, 0.6931472
  %v2176 = vlog2.pop %v2113
  %v2177 = vmul.f32 %v2176, 0.6931472
  %v2178 = vlog2.pop %v2115
  %v2179 = vmul.f32 %v2178, 0.6931472
  %v2180 = vlog2.pop %v2117
  %v2181 = vmul.f32 %v2180, 0.6931472
  %v2182 = vlog2.pop %v2119
  %v2183 = vmul.f32 %v2182, 0.6931472
  %v2184 = vlog2.pop %v2121
  %v2185 = vmul.f32 %v2184, 0.6931472
  %v2186 = vlog2.pop %v2123
  %v2187 = vmul.f32 %v2186, 0.6931472
  %v2188 = vlog2.pop %v2125
  %v2189 = vmul.f32 %v2188, 0.6931472
  %v2190 = vlog2.pop %v2127
  %v2191 = vmul.f32 %v2190, 0.6931472
  %v2192 = vlog2.pop %v2129
  %v2193 = vmul.f32 %v2192, 0.6931472
  %v2194 = vsub.f32 %v1970, %v2131
  %v2195 = vsub.f32 %v1971, %v2133
  %v2196 = vsub.f32 %v1972, %v2135
  %v2197 = vsub.f32 %v1973, %v2137
  %v2198 = vsub.f32 %v1974, %v2139
  %v2199 = vsub.f32 %v1975, %v2141
  %v2200 = vsub.f32 %v1976, %v2143
  %v2201 = vsub.f32 %v1977, %v2145
  %v2202 = vsub.f32 %v1978, %v2147
  %v2203 = vsub.f32 %v1979, %v2149
  %v2204 = vsub.f32 %v1980, %v2151
  %v2205 = vsub.f32 %v1981, %v2153
  %v2206 = vsub.f32 %v1982, %v2155
  %v2207 = vsub.f32 %v1983, %v2157
  %v2208 = vsub.f32 %v1984, %v2159
  %v2209 = vsub.f32 %v1985, %v2161
  %v2210 = vsub.f32 %v1986, %v2163
  %v2211 = vsub.f32 %v1987, %v2165
  %v2212 = vsub.f32 %v1988, %v2167
  %v2213 = vsub.f32 %v1989, %v2169
  %v2214 = vsub.f32 %v1990, %v2171
  %v2215 = vsub.f32 %v1991, %v2173
  %v2216 = vsub.f32 %v1992, %v2175
  %v2217 = vsub.f32 %v1993, %v2177
  %v2218 = vsub.f32 %v1994, %v2179
  %v2219 = vsub.f32 %v1995, %v2181
  %v2220 = vsub.f32 %v1996, %v2183
  %v2221 = vsub.f32 %v1997, %v2185
  %v2222 = vsub.f32 %v1998, %v2187
  %v2223 = vsub.f32 %v1999, %v2189
  %v2224 = vsub.f32 %v2000, %v2191
  %v2225 = vsub.f32 %v2001, %v2193
  %2226 = vst [vmem:[%s7] sm:$0xff] %v2194
  %2227 = vst [vmem:[%s7 + $0x8] sm:$0xff] %v2195
  %2228 = vst [vmem:[%s7 + $0x10] sm:$0xff] %v2196
  %2229 = vst [vmem:[%s7 + $0x18] sm:$0xff] %v2197
  %2230 = vst [vmem:[%s7 + $0x20] sm:$0xff] %v2198
  %2231 = vst [vmem:[%s7 + $0x28] sm:$0xff] %v2199
  %2232 = vst [vmem:[%s7 + $0x30] sm:$0xff] %v2200
  %2233 = vst [vmem:[%s7 + $0x38] sm:$0xff] %v2201
  %2234 = vst [vmem:[%s7 + $0x40] sm:$0xff] %v2202
  %2235 = vst [vmem:[%s7 + $0x48] sm:$0xff] %v2203
  %2236 = vst [vmem:[%s7 + $0x50] sm:$0xff] %v2204
  %2237 = vst [vmem:[%s7 + $0x58] sm:$0xff] %v2205
  %2238 = vst [vmem:[%s7 + $0x60] sm:$0xff] %v2206
  %2239 = vst [vmem:[%s7 + $0x68] sm:$0xff] %v2207
  %2240 = vst [vmem:[%s7 + $0x70] sm:$0xff] %v2208
  %2241 = vst [vmem:[%s7 + $0x78] sm:$0xff] %v2209
  %2242 = vst [vmem:[%s7 + $0x80] sm:$0xff] %v2210
  %2243 = vst [vmem:[%s7 + $0x88] sm:$0xff] %v2211
  %2244 = vst [vmem:[%s7 + $0x90] sm:$0xff] %v2212
  %2245 = vst [vmem:[%s7 + $0x98] sm:$0xff] %v2213
  %2246 = vst [vmem:[%s7 + $0xa0] sm:$0xff] %v2214
  %2247 = vst [vmem:[%s7 + $0xa8] sm:$0xff] %v2215
  %2248 = vst [vmem:[%s7 + $0xb0] sm:$0xff] %v2216
  %2249 = vst [vmem:[%s7 + $0xb8] sm:$0xff] %v2217
  %2250 = vst [vmem:[%s7 + $0xc0] sm:$0xff] %v2218
  %2251 = vst [vmem:[%s7 + $0xc8] sm:$0xff] %v2219
  %2252 = vst [vmem:[%s7 + $0xd0] sm:$0xff] %v2220
  %2253 = vst [vmem:[%s7 + $0xd8] sm:$0xff] %v2221
  %2254 = vst [vmem:[%s7 + $0xe0] sm:$0xff] %v2222
  %2255 = vst [vmem:[%s7 + $0xe8] sm:$0xff] %v2223
  %2256 = vst [vmem:[%s7 + $0xf0] sm:$0xff] %v2224
  %2257 = vst [vmem:[%s7 + $0xf8] sm:$0xff] %v2225
  // Predicated region
  $region30: #{sage_forward.1} parent=0 // pred_check
    _
  $region31: #{sage_forward.1} parent=0 // pred_check_branch
    %2259 = sbr.rel (0) target = $region33
  $region32: #{sage_forward.1} parent=0 // pred_region
    _
  $region33: #{sage_forward.1} parent=0 // pred_fallthru
    _
  // Predicated region
  $region34: #{sage_forward.1} parent=0 // pred_check
    _
  $region35: #{sage_forward.1} parent=0 // pred_check_branch
    %2261 = sbr.rel (0) target = $region37
  $region36: #{sage_forward.1} parent=0 // pred_region
    _
  $region37: #{sage_forward.1} parent=0 // pred_fallthru
    _

</llo_original>
